<compile_context>
chip_gen: v5e
topology: v5e:2x2
jax: 0.10.0
libtpu: 0.0.40
codegen_flags: <defaults>
</compile_context>

<pallas_src>
import functools

import jax
import jax.numpy as jnp
from jax.experimental import pallas as pl
from jax.experimental.pallas import tpu as pltpu


# ----------------------------------------------------------------------------
# helpers
# ----------------------------------------------------------------------------
def _layernorm(x, g, b, eps=1e-5):
    mu = jnp.mean(x, axis=-1, keepdims=True)
    var = jnp.mean((x - mu) ** 2, axis=-1, keepdims=True)
    return (x - mu) * jax.lax.rsqrt(var + eps) * g + b


# ----------------------------------------------------------------------------
# Per-batch-element fused step:
#   linear_seq + linear_non_seq + src assembly (padded to T_pad rows)
#   + 1 post-norm transformer encoder layer (MHA + FFN + 2x LayerNorm).
# ----------------------------------------------------------------------------
def _encoder_step_kernel(
        seq_in_ref, ns_in_ref,
        w_seq_ref, b_seq_ref, w_ns_ref, b_ns_ref,
        w_qkv_ref, b_qkv_ref, w_o_ref, b_o_ref,
        g1_ref, be1_ref, w1_ref, b1_ref, w2_ref, b2_ref, g2_ref, be2_ref,
        src_ref, enc_ref,
        *, seq_len, hid, n_heads, t_pad):
    S, H = seq_len, hid
    T = S + 1
    dh = H // n_heads

    # ---- 1) input projections (bf16 MXU ops, f32 accumulation) ----
    seq_h = jnp.dot(seq_in_ref[0], w_seq_ref[...],
                    preferred_element_type=jnp.float32) + b_seq_ref[...]        # [S, H]
    ns_h = jnp.dot(ns_in_ref[0], w_ns_ref[...],
                   preferred_element_type=jnp.float32) + b_ns_ref[...]          # [1, H]

    # ---- 2) assemble padded src block: S seq rows + 1 non-seq row + zero pad ----
    parts = [seq_h, ns_h]
    if t_pad > T:
        parts.append(jnp.zeros((t_pad - T, H), jnp.float32))
    src = jnp.concatenate(parts, axis=0)                                        # [t_pad, H] f32
    src_ref[0] = src

    # ---- 3) fused QKV projection, single [t_pad,H]@[H,3H] matmul ----
    #      (1/sqrt(dh) is pre-folded into the Q columns of w_qkv / b_qkv)
    qkv = jnp.dot(src.astype(jnp.bfloat16), w_qkv_ref[...],
                  preferred_element_type=jnp.float32) + b_qkv_ref[...]          # [t_pad, 3H]
    qkv = qkv.astype(jnp.bfloat16)                                              # cast once
    q = qkv[:, :H]
    k = qkv[:, H:2 * H]
    v = qkv[:, 2 * H:]

    # ---- 4) multi-head attention; pad key columns masked; heads concatenated ----
    col = jax.lax.broadcasted_iota(jnp.int32, (1, t_pad), 1)
    key_bias = jnp.where(col < T, 0.0, -1e30).astype(jnp.float32)               # [1, t_pad]

    o_heads = []
    for h in range(n_heads):
        sl = slice(h * dh, (h + 1) * dh)
        s = jax.lax.dot_general(q[:, sl], k[:, sl], (((1,), (1,)), ((), ())),
                                preferred_element_type=jnp.float32)             # [t_pad, t_pad]
        s = s + key_bias
        s = s - jnp.max(s, axis=-1, keepdims=True)
        p = jnp.exp(s)
        p = p * pl.reciprocal(jnp.sum(p, axis=-1, keepdims=True), approx=True)
        o_heads.append(jnp.dot(p.astype(jnp.bfloat16), v[:, sl],
                               preferred_element_type=jnp.float32))             # [t_pad, dh]
    o_all = jnp.concatenate(o_heads, axis=1)                                    # [t_pad, H] f32

    # single folded output projection (replaces n_heads K=8 dots + f32 acc)
    attn = jnp.dot(o_all.astype(jnp.bfloat16), w_o_ref[...],
                   preferred_element_type=jnp.float32) + b_o_ref[...]           # [t_pad, H]

    # ---- 5) post-norm 1, FFN, post-norm 2 — all on the full padded block ----
    x1 = _layernorm(src + attn, g1_ref[...], be1_ref[...])                      # [t_pad, H]
    ff = jnp.dot(x1.astype(jnp.bfloat16), w1_ref[...],
                 preferred_element_type=jnp.float32) + b1_ref[...]              # [t_pad, F]
    ff = jnp.maximum(ff, 0.0)                                                   # ReLU
    ff = jnp.dot(ff.astype(jnp.bfloat16), w2_ref[...],
                 preferred_element_type=jnp.float32) + b2_ref[...]              # [t_pad, H]
    enc_ref[0] = _layernorm(x1 + ff, g2_ref[...], be2_ref[...])


def fused_unified_encoder(seq_inp, ns_inp, params, *, seq_len, hid, n_heads):
    """seq_inp: [B, S, seq_in] bf16, ns_inp: [B, 1, ns_in] bf16 -> (src, enc) [B, T, H]."""
    B = seq_inp.shape[0]
    T = seq_len + 1
    t_pad = ((T + 7) // 8) * 8                       # sublane-aligned row block per batch

    order = ["w_seq", "b_seq", "w_ns", "b_ns", "w_qkv", "b_qkv", "w_o", "b_o",
             "g1", "be1", "w1", "b1", "w2", "b2", "g2", "be2"]
    weights = [params[k] for k in order]

    def full_spec(a):
        nd = a.ndim
        return pl.BlockSpec(a.shape, lambda b, _nd=nd: (0,) * _nd)

    in_specs = [
        pl.BlockSpec((1, seq_len, seq_inp.shape[-1]), lambda b: (b, 0, 0)),
        pl.BlockSpec((1, 1, ns_inp.shape[-1]), lambda b: (b, 0, 0)),
    ] + [full_spec(w) for w in weights]
    out_specs = (pl.BlockSpec((1, t_pad, hid), lambda b: (b, 0, 0)),
                 pl.BlockSpec((1, t_pad, hid), lambda b: (b, 0, 0)))

    kernel = functools.partial(_encoder_step_kernel, seq_len=seq_len, hid=hid,
                               n_heads=n_heads, t_pad=t_pad)
    src_pad, enc_pad = pl.pallas_call(
        kernel,
        grid=(B,),
        in_specs=in_specs,
        out_specs=out_specs,
        out_shape=(jax.ShapeDtypeStruct((B, t_pad, hid), jnp.float32),   # src_inp (padded)
                   jax.ShapeDtypeStruct((B, t_pad, hid), jnp.float32)),  # enc_src (padded)
        compiler_params=pltpu.CompilerParams(
            dimension_semantics=("parallel",)),      # v7x: shard batch over 2 TCs
    )(seq_inp, ns_inp, *weights)

    # drop the pad rows (free slice on the host side)
    return src_pad[:, :T, :], enc_pad[:, :T, :]


# ----------------------------------------------------------------------------
# Plain-JAX glue: categorical embedding lookup (eval-mode dropout = identity)
# ----------------------------------------------------------------------------
def cat_embed(cat_data, tables):
    """cat_data: [..., n_feats] int32; tables[i]: [vocab_i, dim_i]."""
    outs = [jnp.take(tables[i], cat_data[..., i], axis=0) for i in range(len(tables))]
    return jnp.concatenate(outs, axis=-1)


# ----------------------------------------------------------------------------
# Model wrapper mirroring UnifiedTransformerEncoder.forward
# ----------------------------------------------------------------------------
class UnifiedTransformerEncoderPallas:
    def __init__(self, key, emb_dims_non_seq, emb_dims_seq,
                 hidden_size, seq_cont_count, non_seq_cont_count,
                 n_heads=4, ffn_dim=64):
        assert hidden_size % n_heads == 0, "hidden_size must be divisible by n_heads"
        self.hid = hidden_size
        self.n_heads = n_heads
        keys = iter(jax.random.split(key, 64))

        def init(shape, scale=0.05):
            return jax.random.normal(next(keys), shape, jnp.float32) * scale

        # CategoricalEmbedding tables
        self.seq_tables = [init((v, d)) for (v, d) in emb_dims_seq]
        self.non_seq_tables = [init((v, d)) for (v, d) in emb_dims_non_seq]
        seq_emb_size = sum(d for _, d in emb_dims_seq)
        non_seq_emb_size = sum(d for _, d in emb_dims_non_seq)

        seq_in = seq_emb_size + seq_cont_count
        ns_in = non_seq_emb_size + non_seq_cont_count
        H, F = hidden_size, ffn_dim
        dh = H // n_heads
        scale = 1.0 / float(dh) ** 0.5

        wq, wk, wv = init((H, H)), init((H, H)), init((H, H))
        bq, bk, bv = init((1, H)), init((1, H)), init((1, H))

        # Matmul operands stored in bf16 (MXU path); biases / LN params stay f32.
        # 1/sqrt(dh) attention scale folded into the Q part of w_qkv / b_qkv.
        self.params = {
            "w_seq": init((seq_in, H)).astype(jnp.bfloat16), "b_seq": init((1, H)),
            "w_ns": init((ns_in, H)).astype(jnp.bfloat16), "b_ns": init((1, H)),
            "w_qkv": jnp.concatenate([wq * scale, wk, wv], axis=1).astype(jnp.bfloat16),
            "b_qkv": jnp.concatenate([bq * scale, bk, bv], axis=1),
            "w_o": init((H, H)).astype(jnp.bfloat16), "b_o": init((1, H)),
            "g1": jnp.ones((1, H), jnp.float32), "be1": jnp.zeros((1, H), jnp.float32),
            "w1": init((H, F)).astype(jnp.bfloat16), "b1": init((1, F)),
            "w2": init((F, H)).astype(jnp.bfloat16), "b2": init((1, H)),
            "g2": jnp.ones((1, H), jnp.float32), "be2": jnp.zeros((1, H), jnp.float32),
        }

    def __call__(self, seq_cat, seq_cont, non_seq_cat, non_seq_cont):
        B, S = seq_cat.shape[:2]
        T = S + 1
        H = self.hid

        # seq branch: embed -> cat continuous -> bf16 [B, S, seq_in]
        seq_emb = cat_embed(seq_cat, self.seq_tables)
        seq_inp = jnp.concatenate([seq_emb, seq_cont], axis=-1).astype(jnp.bfloat16)

        # non-seq branch: embed -> cat continuous -> bf16 [B, 1, ns_in]
        ns_emb = cat_embed(non_seq_cat, self.non_seq_tables)
        ns_inp = jnp.concatenate([ns_emb, non_seq_cont], axis=-1)[:, None, :]
        ns_inp = ns_inp.astype(jnp.bfloat16)

        src_inp, enc_src = fused_unified_encoder(
            seq_inp, ns_inp, self.params,
            seq_len=S, hid=H, n_heads=self.n_heads)                   # [B, T, H] each

        # TODO(synk): injected transformer_encoder may derive a padding mask;
        #             dense float inputs here yield an all-valid mask (unused in attention).
        src_mask = jnp.ones((B, 1, 1, T), dtype=jnp.bool_)
        return enc_src, src_mask, src_inp


# ----------------------------------------------------------------------------
if __name__ == "__main__":
    key = jax.random.PRNGKey(0)
    k_model, k1, k2, k3, k4 = jax.random.split(key, 5)

    B, S, H = 2, 8, 32
    emb_dims_seq = [(10, 4), (12, 6)]      # -> seq emb size 10
    emb_dims_non_seq = [(7, 5)]            # -> non-seq emb size 5
    seq_cont_count, non_seq_cont_count = 3, 2

    model = UnifiedTransformerEncoderPallas(
        k_model, emb_dims_non_seq, emb_dims_seq, H,
        seq_cont_count, non_seq_cont_count, n_heads=4, ffn_dim=64)

    seq_cat = jax.random.randint(k1, (B, S, len(emb_dims_seq)), 0, 10, dtype=jnp.int32)
    seq_cont = jax.random.normal(k2, (B, S, seq_cont_count), jnp.float32)
    non_seq_cat = jax.random.randint(k3, (B, len(emb_dims_non_seq)), 0, 7, dtype=jnp.int32)
    non_seq_cont = jax.random.normal(k4, (B, non_seq_cont_count), jnp.float32)

    enc_src, src_mask, src_inp = model(seq_cat, seq_cont, non_seq_cat, non_seq_cont)
    jax.block_until_ready((enc_src, src_mask, src_inp))

    assert enc_src.shape == (B, S + 1, H)
    assert src_inp.shape == (B, S + 1, H)
    assert src_mask.shape == (B, 1, 1, S + 1)
    assert bool(jnp.all(jnp.isfinite(enc_src)))
    assert bool(jnp.all(jnp.isfinite(src_inp)))
    print("KERNEL_OK")
</pallas_src>

<mosaic_0001>
module attributes {stable_mosaic.version = 11 : i64} {
  func.func @_encoder_step_kernel(%arg0: i32, %arg1: memref<1x8x13xbf16, #tpu.memory_space<vmem>>, %arg2: memref<1x1x7xbf16, #tpu.memory_space<vmem>>, %arg3: memref<13x32xbf16, #tpu.memory_space<vmem>>, %arg4: memref<1x32xf32, #tpu.memory_space<vmem>>, %arg5: memref<7x32xbf16, #tpu.memory_space<vmem>>, %arg6: memref<1x32xf32, #tpu.memory_space<vmem>>, %arg7: memref<32x96xbf16, #tpu.memory_space<vmem>>, %arg8: memref<1x96xf32, #tpu.memory_space<vmem>>, %arg9: memref<32x32xbf16, #tpu.memory_space<vmem>>, %arg10: memref<1x32xf32, #tpu.memory_space<vmem>>, %arg11: memref<1x32xf32, #tpu.memory_space<vmem>>, %arg12: memref<1x32xf32, #tpu.memory_space<vmem>>, %arg13: memref<32x64xbf16, #tpu.memory_space<vmem>>, %arg14: memref<1x64xf32, #tpu.memory_space<vmem>>, %arg15: memref<64x32xbf16, #tpu.memory_space<vmem>>, %arg16: memref<1x32xf32, #tpu.memory_space<vmem>>, %arg17: memref<1x32xf32, #tpu.memory_space<vmem>>, %arg18: memref<1x32xf32, #tpu.memory_space<vmem>>, %arg19: memref<1x16x32xf32, #tpu.memory_space<vmem>>, %arg20: memref<1x16x32xf32, #tpu.memory_space<vmem>>) attributes {dimension_semantics = [#tpu.dimension_semantics<parallel>], iteration_bounds = array<i64: 2>, scalar_prefetch = 0 : i64, scratch_operands = 0 : i64, tpu.core_type = #tpu.core_type<tc>, window_params = [{transform_indices = @transform_0, window_bounds = array<i64: 1, 8, 13>}, {transform_indices = @transform_1, window_bounds = array<i64: 1, 1, 7>}, {pipeline_mode = #tpu.pipeline_mode<synchronous>, transform_indices = @transform_2, window_bounds = array<i64: 13, 32>}, {pipeline_mode = #tpu.pipeline_mode<synchronous>, transform_indices = @transform_3, window_bounds = array<i64: 1, 32>}, {pipeline_mode = #tpu.pipeline_mode<synchronous>, transform_indices = @transform_4, window_bounds = array<i64: 7, 32>}, {pipeline_mode = #tpu.pipeline_mode<synchronous>, transform_indices = @transform_5, window_bounds = array<i64: 1, 32>}, {pipeline_mode = #tpu.pipeline_mode<synchronous>, transform_indices = @transform_6, window_bounds = array<i64: 32, 96>}, {pipeline_mode = #tpu.pipeline_mode<synchronous>, transform_indices = @transform_7, window_bounds = array<i64: 1, 96>}, {pipeline_mode = #tpu.pipeline_mode<synchronous>, transform_indices = @transform_8, window_bounds = array<i64: 32, 32>}, {pipeline_mode = #tpu.pipeline_mode<synchronous>, transform_indices = @transform_9, window_bounds = array<i64: 1, 32>}, {pipeline_mode = #tpu.pipeline_mode<synchronous>, transform_indices = @transform_10, window_bounds = array<i64: 1, 32>}, {pipeline_mode = #tpu.pipeline_mode<synchronous>, transform_indices = @transform_11, window_bounds = array<i64: 1, 32>}, {pipeline_mode = #tpu.pipeline_mode<synchronous>, transform_indices = @transform_12, window_bounds = array<i64: 32, 64>}, {pipeline_mode = #tpu.pipeline_mode<synchronous>, transform_indices = @transform_13, window_bounds = array<i64: 1, 64>}, {pipeline_mode = #tpu.pipeline_mode<synchronous>, transform_indices = @transform_14, window_bounds = array<i64: 64, 32>}, {pipeline_mode = #tpu.pipeline_mode<synchronous>, transform_indices = @transform_15, window_bounds = array<i64: 1, 32>}, {pipeline_mode = #tpu.pipeline_mode<synchronous>, transform_indices = @transform_16, window_bounds = array<i64: 1, 32>}, {pipeline_mode = #tpu.pipeline_mode<synchronous>, transform_indices = @transform_17, window_bounds = array<i64: 1, 32>}, {transform_indices = @transform_18, window_bounds = array<i64: 1, 16, 32>}, {transform_indices = @transform_19, window_bounds = array<i64: 1, 16, 32>}]} {
    %c0 = arith.constant 0 : index
    %c0_0 = arith.constant 0 : index
    %c0_1 = arith.constant 0 : index
    %0 = vector.load %arg1[%c0, %c0_0, %c0_1] : memref<1x8x13xbf16, #tpu.memory_space<vmem>>, vector<1x8x13xbf16>
    %1 = vector.shape_cast %0 : vector<1x8x13xbf16> to vector<8x13xbf16>
    %c0_2 = arith.constant 0 : index
    %c0_3 = arith.constant 0 : index
    %2 = vector.load %arg3[%c0_2, %c0_3] : memref<13x32xbf16, #tpu.memory_space<vmem>>, vector<13x32xbf16>
    %cst = arith.constant dense<0.000000e+00> : vector<8x32xf32>
    %3 = tpu.matmul %1, %2, %cst {dimension_numbers = #tpu.dot_dimension_numbers<[1], [0], [0], [1], [0, 0, 1, 1], [], []>} : vector<8x13xbf16>, vector<13x32xbf16>, vector<8x32xf32> -> vector<8x32xf32>
    %c0_4 = arith.constant 0 : index
    %c0_5 = arith.constant 0 : index
    %4 = vector.load %arg4[%c0_4, %c0_5] : memref<1x32xf32, #tpu.memory_space<vmem>>, vector<1x32xf32>
    %5 = vector.broadcast %4 : vector<1x32xf32> to vector<8x32xf32>
    %6 = arith.addf %3, %5 : vector<8x32xf32>
    %c0_6 = arith.constant 0 : index
    %c0_7 = arith.constant 0 : index
    %c0_8 = arith.constant 0 : index
    %7 = vector.load %arg2[%c0_6, %c0_7, %c0_8] : memref<1x1x7xbf16, #tpu.memory_space<vmem>>, vector<1x1x7xbf16>
    %8 = vector.shape_cast %7 : vector<1x1x7xbf16> to vector<1x7xbf16>
    %c0_9 = arith.constant 0 : index
    %c0_10 = arith.constant 0 : index
    %9 = vector.load %arg5[%c0_9, %c0_10] : memref<7x32xbf16, #tpu.memory_space<vmem>>, vector<7x32xbf16>
    %cst_11 = arith.constant dense<0.000000e+00> : vector<1x32xf32>
    %10 = tpu.matmul %8, %9, %cst_11 {dimension_numbers = #tpu.dot_dimension_numbers<[1], [0], [0], [1], [0, 0, 1, 1], [], []>} : vector<1x7xbf16>, vector<7x32xbf16>, vector<1x32xf32> -> vector<1x32xf32>
    %c0_12 = arith.constant 0 : index
    %c0_13 = arith.constant 0 : index
    %11 = vector.load %arg6[%c0_12, %c0_13] : memref<1x32xf32, #tpu.memory_space<vmem>>, vector<1x32xf32>
    %12 = arith.addf %10, %11 : vector<1x32xf32>
    %cst_14 = arith.constant 0.000000e+00 : f32
    %13 = vector.broadcast %cst_14 : f32 to vector<7x32xf32>
    %14 = tpu.concatenate %6, %12, %13 in 0 : vector<8x32xf32>, vector<1x32xf32>, vector<7x32xf32> -> vector<16x32xf32>
    %c0_15 = arith.constant 0 : index
    %c0_16 = arith.constant 0 : index
    %c0_17 = arith.constant 0 : index
    %15 = vector.load %arg19[%c0_15, %c0_16, %c0_17] : memref<1x16x32xf32, #tpu.memory_space<vmem>>, vector<1x16x32xf32>
    %16 = vector.shape_cast %15 : vector<1x16x32xf32> to vector<16x32xf32>
    %17 = vector.shape_cast %14 : vector<16x32xf32> to vector<1x16x32xf32>
    tpu.vector_store %arg19[%c0_15, %c0_16, %c0_17], %17 {strides = array<i32>} : memref<1x16x32xf32, #tpu.memory_space<vmem>>, vector<1x16x32xf32>,
    %18 = arith.truncf %14 : vector<16x32xf32> to vector<16x32xbf16>
    %c0_18 = arith.constant 0 : index
    %c0_19 = arith.constant 0 : index
    %19 = vector.load %arg7[%c0_18, %c0_19] : memref<32x96xbf16, #tpu.memory_space<vmem>>, vector<32x96xbf16>
    %cst_20 = arith.constant dense<0.000000e+00> : vector<16x96xf32>
    %20 = tpu.matmul %18, %19, %cst_20 {dimension_numbers = #tpu.dot_dimension_numbers<[1], [0], [0], [1], [0, 0, 1, 1], [], []>} : vector<16x32xbf16>, vector<32x96xbf16>, vector<16x96xf32> -> vector<16x96xf32>
    %c0_21 = arith.constant 0 : index
    %c0_22 = arith.constant 0 : index
    %21 = vector.load %arg8[%c0_21, %c0_22] : memref<1x96xf32, #tpu.memory_space<vmem>>, vector<1x96xf32>
    %22 = vector.broadcast %21 : vector<1x96xf32> to vector<16x96xf32>
    %23 = arith.addf %20, %22 : vector<16x96xf32>
    %24 = arith.truncf %23 : vector<16x96xf32> to vector<16x96xbf16>
    %25 = vector.extract_strided_slice %24 {offsets = [0, 0], sizes = [16, 32], strides = [1, 1]} : vector<16x96xbf16> to vector<16x32xbf16>
    %26 = vector.extract_strided_slice %24 {offsets = [0, 32], sizes = [16, 32], strides = [1, 1]} : vector<16x96xbf16> to vector<16x32xbf16>
    %27 = vector.extract_strided_slice %24 {offsets = [0, 64], sizes = [16, 32], strides = [1, 1]} : vector<16x96xbf16> to vector<16x32xbf16>
    %28 = tpu.iota {dimensions = array<i32: 1>} : vector<1x16xi32>
    %c9_i32 = arith.constant 9 : i32
    %29 = vector.broadcast %c9_i32 : i32 to vector<1x16xi32>
    %30 = arith.cmpi slt, %28, %29 : vector<1x16xi32>
    %cst_23 = arith.constant 0.000000e+00 : f32
    %cst_24 = arith.constant -1.000000e+30 : f32
    %31 = vector.broadcast %cst_23 : f32 to vector<1x16xf32>
    %32 = vector.broadcast %cst_24 : f32 to vector<1x16xf32>
    %33 = arith.select %30, %31, %32 : vector<1x16xi1>, vector<1x16xf32>
    %34 = vector.extract_strided_slice %25 {offsets = [0, 0], sizes = [16, 8], strides = [1, 1]} : vector<16x32xbf16> to vector<16x8xbf16>
    %35 = vector.extract_strided_slice %26 {offsets = [0, 0], sizes = [16, 8], strides = [1, 1]} : vector<16x32xbf16> to vector<16x8xbf16>
    %cst_25 = arith.constant dense<0.000000e+00> : vector<16x16xf32>
    %36 = tpu.matmul %34, %35, %cst_25 {dimension_numbers = #tpu.dot_dimension_numbers<[1], [1], [0], [0], [0, 0, 1, 0], [], []>} : vector<16x8xbf16>, vector<16x8xbf16>, vector<16x16xf32> -> vector<16x16xf32>
    %37 = vector.broadcast %33 : vector<1x16xf32> to vector<16x16xf32>
    %38 = arith.addf %36, %37 : vector<16x16xf32>
    %cst_26 = arith.constant dense<0xFF800000> : vector<16xf32>
    %39 = vector.multi_reduction <maximumf>, %38, %cst_26 [1] : vector<16x16xf32> to vector<16xf32>
    %40 = vector.shape_cast %39 : vector<16xf32> to vector<16x1xf32>
    %41 = vector.broadcast %40 : vector<16x1xf32> to vector<16x16xf32>
    %42 = arith.subf %38, %41 : vector<16x16xf32>
    %43 = math.exp %42 : vector<16x16xf32>
    %cst_27 = arith.constant dense<0.000000e+00> : vector<16xf32>
    %44 = vector.multi_reduction <add>, %43, %cst_27 [1] : vector<16x16xf32> to vector<16xf32>
    %45 = vector.shape_cast %44 : vector<16xf32> to vector<16x1xf32>
    %46 = tpu.reciprocal %45 {approx = true} : vector<16x1xf32> -> vector<16x1xf32>
    %47 = vector.broadcast %46 : vector<16x1xf32> to vector<16x16xf32>
    %48 = arith.mulf %43, %47 : vector<16x16xf32>
    %49 = arith.truncf %48 : vector<16x16xf32> to vector<16x16xbf16>
    %50 = vector.extract_strided_slice %27 {offsets = [0, 0], sizes = [16, 8], strides = [1, 1]} : vector<16x32xbf16> to vector<16x8xbf16>
    %cst_28 = arith.constant dense<0.000000e+00> : vector<16x8xf32>
    %51 = tpu.matmul %49, %50, %cst_28 {dimension_numbers = #tpu.dot_dimension_numbers<[1], [0], [0], [1], [0, 0, 1, 1], [], []>} : vector<16x16xbf16>, vector<16x8xbf16>, vector<16x8xf32> -> vector<16x8xf32>
    %52 = vector.extract_strided_slice %25 {offsets = [0, 8], sizes = [16, 8], strides = [1, 1]} : vector<16x32xbf16> to vector<16x8xbf16>
    %53 = vector.extract_strided_slice %26 {offsets = [0, 8], sizes = [16, 8], strides = [1, 1]} : vector<16x32xbf16> to vector<16x8xbf16>
    %cst_29 = arith.constant dense<0.000000e+00> : vector<16x16xf32>
    %54 = tpu.matmul %52, %53, %cst_29 {dimension_numbers = #tpu.dot_dimension_numbers<[1], [1], [0], [0], [0, 0, 1, 0], [], []>} : vector<16x8xbf16>, vector<16x8xbf16>, vector<16x16xf32> -> vector<16x16xf32>
    %55 = vector.broadcast %33 : vector<1x16xf32> to vector<16x16xf32>
    %56 = arith.addf %54, %55 : vector<16x16xf32>
    %cst_30 = arith.constant dense<0xFF800000> : vector<16xf32>
    %57 = vector.multi_reduction <maximumf>, %56, %cst_30 [1] : vector<16x16xf32> to vector<16xf32>
    %58 = vector.shape_cast %57 : vector<16xf32> to vector<16x1xf32>
    %59 = vector.broadcast %58 : vector<16x1xf32> to vector<16x16xf32>
    %60 = arith.subf %56, %59 : vector<16x16xf32>
    %61 = math.exp %60 : vector<16x16xf32>
    %cst_31 = arith.constant dense<0.000000e+00> : vector<16xf32>
    %62 = vector.multi_reduction <add>, %61, %cst_31 [1] : vector<16x16xf32> to vector<16xf32>
    %63 = vector.shape_cast %62 : vector<16xf32> to vector<16x1xf32>
    %64 = tpu.reciprocal %63 {approx = true} : vector<16x1xf32> -> vector<16x1xf32>
    %65 = vector.broadcast %64 : vector<16x1xf32> to vector<16x16xf32>
    %66 = arith.mulf %61, %65 : vector<16x16xf32>
    %67 = arith.truncf %66 : vector<16x16xf32> to vector<16x16xbf16>
    %68 = vector.extract_strided_slice %27 {offsets = [0, 8], sizes = [16, 8], strides = [1, 1]} : vector<16x32xbf16> to vector<16x8xbf16>
    %cst_32 = arith.constant dense<0.000000e+00> : vector<16x8xf32>
    %69 = tpu.matmul %67, %68, %cst_32 {dimension_numbers = #tpu.dot_dimension_numbers<[1], [0], [0], [1], [0, 0, 1, 1], [], []>} : vector<16x16xbf16>, vector<16x8xbf16>, vector<16x8xf32> -> vector<16x8xf32>
    %70 = vector.extract_strided_slice %25 {offsets = [0, 16], sizes = [16, 8], strides = [1, 1]} : vector<16x32xbf16> to vector<16x8xbf16>
    %71 = vector.extract_strided_slice %26 {offsets = [0, 16], sizes = [16, 8], strides = [1, 1]} : vector<16x32xbf16> to vector<16x8xbf16>
    %cst_33 = arith.constant dense<0.000000e+00> : vector<16x16xf32>
    %72 = tpu.matmul %70, %71, %cst_33 {dimension_numbers = #tpu.dot_dimension_numbers<[1], [1], [0], [0], [0, 0, 1, 0], [], []>} : vector<16x8xbf16>, vector<16x8xbf16>, vector<16x16xf32> -> vector<16x16xf32>
    %73 = vector.broadcast %33 : vector<1x16xf32> to vector<16x16xf32>
    %74 = arith.addf %72, %73 : vector<16x16xf32>
    %cst_34 = arith.constant dense<0xFF800000> : vector<16xf32>
    %75 = vector.multi_reduction <maximumf>, %74, %cst_34 [1] : vector<16x16xf32> to vector<16xf32>
    %76 = vector.shape_cast %75 : vector<16xf32> to vector<16x1xf32>
    %77 = vector.broadcast %76 : vector<16x1xf32> to vector<16x16xf32>
    %78 = arith.subf %74, %77 : vector<16x16xf32>
    %79 = math.exp %78 : vector<16x16xf32>
    %cst_35 = arith.constant dense<0.000000e+00> : vector<16xf32>
    %80 = vector.multi_reduction <add>, %79, %cst_35 [1] : vector<16x16xf32> to vector<16xf32>
    %81 = vector.shape_cast %80 : vector<16xf32> to vector<16x1xf32>
    %82 = tpu.reciprocal %81 {approx = true} : vector<16x1xf32> -> vector<16x1xf32>
    %83 = vector.broadcast %82 : vector<16x1xf32> to vector<16x16xf32>
    %84 = arith.mulf %79, %83 : vector<16x16xf32>
    %85 = arith.truncf %84 : vector<16x16xf32> to vector<16x16xbf16>
    %86 = vector.extract_strided_slice %27 {offsets = [0, 16], sizes = [16, 8], strides = [1, 1]} : vector<16x32xbf16> to vector<16x8xbf16>
    %cst_36 = arith.constant dense<0.000000e+00> : vector<16x8xf32>
    %87 = tpu.matmul %85, %86, %cst_36 {dimension_numbers = #tpu.dot_dimension_numbers<[1], [0], [0], [1], [0, 0, 1, 1], [], []>} : vector<16x16xbf16>, vector<16x8xbf16>, vector<16x8xf32> -> vector<16x8xf32>
    %88 = vector.extract_strided_slice %25 {offsets = [0, 24], sizes = [16, 8], strides = [1, 1]} : vector<16x32xbf16> to vector<16x8xbf16>
    %89 = vector.extract_strided_slice %26 {offsets = [0, 24], sizes = [16, 8], strides = [1, 1]} : vector<16x32xbf16> to vector<16x8xbf16>
    %cst_37 = arith.constant dense<0.000000e+00> : vector<16x16xf32>
    %90 = tpu.matmul %88, %89, %cst_37 {dimension_numbers = #tpu.dot_dimension_numbers<[1], [1], [0], [0], [0, 0, 1, 0], [], []>} : vector<16x8xbf16>, vector<16x8xbf16>, vector<16x16xf32> -> vector<16x16xf32>
    %91 = vector.broadcast %33 : vector<1x16xf32> to vector<16x16xf32>
    %92 = arith.addf %90, %91 : vector<16x16xf32>
    %cst_38 = arith.constant dense<0xFF800000> : vector<16xf32>
    %93 = vector.multi_reduction <maximumf>, %92, %cst_38 [1] : vector<16x16xf32> to vector<16xf32>
    %94 = vector.shape_cast %93 : vector<16xf32> to vector<16x1xf32>
    %95 = vector.broadcast %94 : vector<16x1xf32> to vector<16x16xf32>
    %96 = arith.subf %92, %95 : vector<16x16xf32>
    %97 = math.exp %96 : vector<16x16xf32>
    %cst_39 = arith.constant dense<0.000000e+00> : vector<16xf32>
    %98 = vector.multi_reduction <add>, %97, %cst_39 [1] : vector<16x16xf32> to vector<16xf32>
    %99 = vector.shape_cast %98 : vector<16xf32> to vector<16x1xf32>
    %100 = tpu.reciprocal %99 {approx = true} : vector<16x1xf32> -> vector<16x1xf32>
    %101 = vector.broadcast %100 : vector<16x1xf32> to vector<16x16xf32>
    %102 = arith.mulf %97, %101 : vector<16x16xf32>
    %103 = arith.truncf %102 : vector<16x16xf32> to vector<16x16xbf16>
    %104 = vector.extract_strided_slice %27 {offsets = [0, 24], sizes = [16, 8], strides = [1, 1]} : vector<16x32xbf16> to vector<16x8xbf16>
    %cst_40 = arith.constant dense<0.000000e+00> : vector<16x8xf32>
    %105 = tpu.matmul %103, %104, %cst_40 {dimension_numbers = #tpu.dot_dimension_numbers<[1], [0], [0], [1], [0, 0, 1, 1], [], []>} : vector<16x16xbf16>, vector<16x8xbf16>, vector<16x8xf32> -> vector<16x8xf32>
    %106 = tpu.concatenate %51, %69, %87, %105 in 1 : vector<16x8xf32>, vector<16x8xf32>, vector<16x8xf32>, vector<16x8xf32> -> vector<16x32xf32>
    %107 = arith.truncf %106 : vector<16x32xf32> to vector<16x32xbf16>
    %c0_41 = arith.constant 0 : index
    %c0_42 = arith.constant 0 : index
    %108 = vector.load %arg9[%c0_41, %c0_42] : memref<32x32xbf16, #tpu.memory_space<vmem>>, vector<32x32xbf16>
    %cst_43 = arith.constant dense<0.000000e+00> : vector<16x32xf32>
    %109 = tpu.matmul %107, %108, %cst_43 {dimension_numbers = #tpu.dot_dimension_numbers<[1], [0], [0], [1], [0, 0, 1, 1], [], []>} : vector<16x32xbf16>, vector<32x32xbf16>, vector<16x32xf32> -> vector<16x32xf32>
    %c0_44 = arith.constant 0 : index
    %c0_45 = arith.constant 0 : index
    %110 = vector.load %arg10[%c0_44, %c0_45] : memref<1x32xf32, #tpu.memory_space<vmem>>, vector<1x32xf32>
    %111 = vector.broadcast %110 : vector<1x32xf32> to vector<16x32xf32>
    %112 = arith.addf %109, %111 : vector<16x32xf32>
    %113 = arith.addf %14, %112 : vector<16x32xf32>
    %c0_46 = arith.constant 0 : index
    %c0_47 = arith.constant 0 : index
    %114 = vector.load %arg11[%c0_46, %c0_47] : memref<1x32xf32, #tpu.memory_space<vmem>>, vector<1x32xf32>
    %c0_48 = arith.constant 0 : index
    %c0_49 = arith.constant 0 : index
    %115 = vector.load %arg12[%c0_48, %c0_49] : memref<1x32xf32, #tpu.memory_space<vmem>>, vector<1x32xf32>
    %cst_50 = arith.constant dense<0.000000e+00> : vector<16xf32>
    %116 = vector.multi_reduction <add>, %113, %cst_50 [1] : vector<16x32xf32> to vector<16xf32>
    %117 = vector.shape_cast %116 : vector<16xf32> to vector<16x1xf32>
    %cst_51 = arith.constant 3.200000e+01 : f32
    %118 = vector.broadcast %cst_51 : f32 to vector<16x1xf32>
    %119 = arith.divf %117, %118 : vector<16x1xf32>
    %120 = vector.broadcast %119 : vector<16x1xf32> to vector<16x32xf32>
    %121 = arith.subf %113, %120 : vector<16x32xf32>
    %122 = arith.mulf %121, %121 : vector<16x32xf32>
    %cst_52 = arith.constant dense<0.000000e+00> : vector<16xf32>
    %123 = vector.multi_reduction <add>, %122, %cst_52 [1] : vector<16x32xf32> to vector<16xf32>
    %124 = vector.shape_cast %123 : vector<16xf32> to vector<16x1xf32>
    %cst_53 = arith.constant 3.200000e+01 : f32
    %125 = vector.broadcast %cst_53 : f32 to vector<16x1xf32>
    %126 = arith.divf %124, %125 : vector<16x1xf32>
    %127 = vector.broadcast %119 : vector<16x1xf32> to vector<16x32xf32>
    %128 = arith.subf %113, %127 : vector<16x32xf32>
    %cst_54 = arith.constant 9.99999974E-6 : f32
    %129 = vector.broadcast %cst_54 : f32 to vector<16x1xf32>
    %130 = arith.addf %126, %129 : vector<16x1xf32>
    %131 = math.rsqrt %130 : vector<16x1xf32>
    %132 = vector.broadcast %131 : vector<16x1xf32> to vector<16x32xf32>
    %133 = arith.mulf %128, %132 : vector<16x32xf32>
    %134 = vector.broadcast %114 : vector<1x32xf32> to vector<16x32xf32>
    %135 = arith.mulf %133, %134 : vector<16x32xf32>
    %136 = vector.broadcast %115 : vector<1x32xf32> to vector<16x32xf32>
    %137 = arith.addf %135, %136 : vector<16x32xf32>
    %138 = arith.truncf %137 : vector<16x32xf32> to vector<16x32xbf16>
    %c0_55 = arith.constant 0 : index
    %c0_56 = arith.constant 0 : index
    %139 = vector.load %arg13[%c0_55, %c0_56] : memref<32x64xbf16, #tpu.memory_space<vmem>>, vector<32x64xbf16>
    %cst_57 = arith.constant dense<0.000000e+00> : vector<16x64xf32>
    %140 = tpu.matmul %138, %139, %cst_57 {dimension_numbers = #tpu.dot_dimension_numbers<[1], [0], [0], [1], [0, 0, 1, 1], [], []>} : vector<16x32xbf16>, vector<32x64xbf16>, vector<16x64xf32> -> vector<16x64xf32>
    %c0_58 = arith.constant 0 : index
    %c0_59 = arith.constant 0 : index
    %141 = vector.load %arg14[%c0_58, %c0_59] : memref<1x64xf32, #tpu.memory_space<vmem>>, vector<1x64xf32>
    %142 = vector.broadcast %141 : vector<1x64xf32> to vector<16x64xf32>
    %143 = arith.addf %140, %142 : vector<16x64xf32>
    %cst_60 = arith.constant 0.000000e+00 : f32
    %144 = vector.broadcast %cst_60 : f32 to vector<16x64xf32>
    %145 = arith.maximumf %143, %144 : vector<16x64xf32>
    %146 = arith.truncf %145 : vector<16x64xf32> to vector<16x64xbf16>
    %c0_61 = arith.constant 0 : index
    %c0_62 = arith.constant 0 : index
    %147 = vector.load %arg15[%c0_61, %c0_62] : memref<64x32xbf16, #tpu.memory_space<vmem>>, vector<64x32xbf16>
    %cst_63 = arith.constant dense<0.000000e+00> : vector<16x32xf32>
    %148 = tpu.matmul %146, %147, %cst_63 {dimension_numbers = #tpu.dot_dimension_numbers<[1], [0], [0], [1], [0, 0, 1, 1], [], []>} : vector<16x64xbf16>, vector<64x32xbf16>, vector<16x32xf32> -> vector<16x32xf32>
    %c0_64 = arith.constant 0 : index
    %c0_65 = arith.constant 0 : index
    %149 = vector.load %arg16[%c0_64, %c0_65] : memref<1x32xf32, #tpu.memory_space<vmem>>, vector<1x32xf32>
    %150 = vector.broadcast %149 : vector<1x32xf32> to vector<16x32xf32>
    %151 = arith.addf %148, %150 : vector<16x32xf32>
    %152 = arith.addf %137, %151 : vector<16x32xf32>
    %c0_66 = arith.constant 0 : index
    %c0_67 = arith.constant 0 : index
    %153 = vector.load %arg17[%c0_66, %c0_67] : memref<1x32xf32, #tpu.memory_space<vmem>>, vector<1x32xf32>
    %c0_68 = arith.constant 0 : index
    %c0_69 = arith.constant 0 : index
    %154 = vector.load %arg18[%c0_68, %c0_69] : memref<1x32xf32, #tpu.memory_space<vmem>>, vector<1x32xf32>
    %cst_70 = arith.constant dense<0.000000e+00> : vector<16xf32>
    %155 = vector.multi_reduction <add>, %152, %cst_70 [1] : vector<16x32xf32> to vector<16xf32>
    %156 = vector.shape_cast %155 : vector<16xf32> to vector<16x1xf32>
    %cst_71 = arith.constant 3.200000e+01 : f32
    %157 = vector.broadcast %cst_71 : f32 to vector<16x1xf32>
    %158 = arith.divf %156, %157 : vector<16x1xf32>
    %159 = vector.broadcast %158 : vector<16x1xf32> to vector<16x32xf32>
    %160 = arith.subf %152, %159 : vector<16x32xf32>
    %161 = arith.mulf %160, %160 : vector<16x32xf32>
    %cst_72 = arith.constant dense<0.000000e+00> : vector<16xf32>
    %162 = vector.multi_reduction <add>, %161, %cst_72 [1] : vector<16x32xf32> to vector<16xf32>
    %163 = vector.shape_cast %162 : vector<16xf32> to vector<16x1xf32>
    %cst_73 = arith.constant 3.200000e+01 : f32
    %164 = vector.broadcast %cst_73 : f32 to vector<16x1xf32>
    %165 = arith.divf %163, %164 : vector<16x1xf32>
    %166 = vector.broadcast %158 : vector<16x1xf32> to vector<16x32xf32>
    %167 = arith.subf %152, %166 : vector<16x32xf32>
    %cst_74 = arith.constant 9.99999974E-6 : f32
    %168 = vector.broadcast %cst_74 : f32 to vector<16x1xf32>
    %169 = arith.addf %165, %168 : vector<16x1xf32>
    %170 = math.rsqrt %169 : vector<16x1xf32>
    %171 = vector.broadcast %170 : vector<16x1xf32> to vector<16x32xf32>
    %172 = arith.mulf %167, %171 : vector<16x32xf32>
    %173 = vector.broadcast %153 : vector<1x32xf32> to vector<16x32xf32>
    %174 = arith.mulf %172, %173 : vector<16x32xf32>
    %175 = vector.broadcast %154 : vector<1x32xf32> to vector<16x32xf32>
    %176 = arith.addf %174, %175 : vector<16x32xf32>
    %c0_75 = arith.constant 0 : index
    %c0_76 = arith.constant 0 : index
    %c0_77 = arith.constant 0 : index
    %177 = vector.load %arg20[%c0_75, %c0_76, %c0_77] : memref<1x16x32xf32, #tpu.memory_space<vmem>>, vector<1x16x32xf32>
    %178 = vector.shape_cast %177 : vector<1x16x32xf32> to vector<16x32xf32>
    %179 = vector.shape_cast %176 : vector<16x32xf32> to vector<1x16x32xf32>
    tpu.vector_store %arg20[%c0_75, %c0_76, %c0_77], %179 {strides = array<i32>} : memref<1x16x32xf32, #tpu.memory_space<vmem>>, vector<1x16x32xf32>,
    return
  }
  func.func @transform_0(%arg0: i32) -> (i32, i32, i32) {
    %c0_i32 = arith.constant 0 : i32
    %c0_i32_0 = arith.constant 0 : i32
    %c0_i32_1 = arith.constant 0 : i32
    return %arg0, %c0_i32, %c0_i32_0 : i32, i32, i32
  }
  func.func @transform_1(%arg0: i32) -> (i32, i32, i32) {
    %c0_i32 = arith.constant 0 : i32
    %c0_i32_0 = arith.constant 0 : i32
    %c0_i32_1 = arith.constant 0 : i32
    return %arg0, %c0_i32, %c0_i32_0 : i32, i32, i32
  }
  func.func @transform_2(%arg0: i32) -> (i32, i32) {
    %c0_i32 = arith.constant 0 : i32
    %c0_i32_0 = arith.constant 0 : i32
    %c0_i32_1 = arith.constant 0 : i32
    return %c0_i32, %c0_i32_0 : i32, i32
  }
  func.func @transform_3(%arg0: i32) -> (i32, i32) {
    %c0_i32 = arith.constant 0 : i32
    %c0_i32_0 = arith.constant 0 : i32
    %c0_i32_1 = arith.constant 0 : i32
    return %c0_i32, %c0_i32_0 : i32, i32
  }
  func.func @transform_4(%arg0: i32) -> (i32, i32) {
    %c0_i32 = arith.constant 0 : i32
    %c0_i32_0 = arith.constant 0 : i32
    %c0_i32_1 = arith.constant 0 : i32
    return %c0_i32, %c0_i32_0 : i32, i32
  }
  func.func @transform_5(%arg0: i32) -> (i32, i32) {
    %c0_i32 = arith.constant 0 : i32
    %c0_i32_0 = arith.constant 0 : i32
    %c0_i32_1 = arith.constant 0 : i32
    return %c0_i32, %c0_i32_0 : i32, i32
  }
  func.func @transform_6(%arg0: i32) -> (i32, i32) {
    %c0_i32 = arith.constant 0 : i32
    %c0_i32_0 = arith.constant 0 : i32
    %c0_i32_1 = arith.constant 0 : i32
    return %c0_i32, %c0_i32_0 : i32, i32
  }
  func.func @transform_7(%arg0: i32) -> (i32, i32) {
    %c0_i32 = arith.constant 0 : i32
    %c0_i32_0 = arith.constant 0 : i32
    %c0_i32_1 = arith.constant 0 : i32
    return %c0_i32, %c0_i32_0 : i32, i32
  }
  func.func @transform_8(%arg0: i32) -> (i32, i32) {
    %c0_i32 = arith.constant 0 : i32
    %c0_i32_0 = arith.constant 0 : i32
    %c0_i32_1 = arith.constant 0 : i32
    return %c0_i32, %c0_i32_0 : i32, i32
  }
  func.func @transform_9(%arg0: i32) -> (i32, i32) {
    %c0_i32 = arith.constant 0 : i32
    %c0_i32_0 = arith.constant 0 : i32
    %c0_i32_1 = arith.constant 0 : i32
    return %c0_i32, %c0_i32_0 : i32, i32
  }
  func.func @transform_10(%arg0: i32) -> (i32, i32) {
    %c0_i32 = arith.constant 0 : i32
    %c0_i32_0 = arith.constant 0 : i32
    %c0_i32_1 = arith.constant 0 : i32
    return %c0_i32, %c0_i32_0 : i32, i32
  }
  func.func @transform_11(%arg0: i32) -> (i32, i32) {
    %c0_i32 = arith.constant 0 : i32
    %c0_i32_0 = arith.constant 0 : i32
    %c0_i32_1 = arith.constant 0 : i32
    return %c0_i32, %c0_i32_0 : i32, i32
  }
  func.func @transform_12(%arg0: i32) -> (i32, i32) {
    %c0_i32 = arith.constant 0 : i32
    %c0_i32_0 = arith.constant 0 : i32
    %c0_i32_1 = arith.constant 0 : i32
    return %c0_i32, %c0_i32_0 : i32, i32
  }
  func.func @transform_13(%arg0: i32) -> (i32, i32) {
    %c0_i32 = arith.constant 0 : i32
    %c0_i32_0 = arith.constant 0 : i32
    %c0_i32_1 = arith.constant 0 : i32
    return %c0_i32, %c0_i32_0 : i32, i32
  }
  func.func @transform_14(%arg0: i32) -> (i32, i32) {
    %c0_i32 = arith.constant 0 : i32
    %c0_i32_0 = arith.constant 0 : i32
    %c0_i32_1 = arith.constant 0 : i32
    return %c0_i32, %c0_i32_0 : i32, i32
  }
  func.func @transform_15(%arg0: i32) -> (i32, i32) {
    %c0_i32 = arith.constant 0 : i32
    %c0_i32_0 = arith.constant 0 : i32
    %c0_i32_1 = arith.constant 0 : i32
    return %c0_i32, %c0_i32_0 : i32, i32
  }
  func.func @transform_16(%arg0: i32) -> (i32, i32) {
    %c0_i32 = arith.constant 0 : i32
    %c0_i32_0 = arith.constant 0 : i32
    %c0_i32_1 = arith.constant 0 : i32
    return %c0_i32, %c0_i32_0 : i32, i32
  }
  func.func @transform_17(%arg0: i32) -> (i32, i32) {
    %c0_i32 = arith.constant 0 : i32
    %c0_i32_0 = arith.constant 0 : i32
    %c0_i32_1 = arith.constant 0 : i32
    return %c0_i32, %c0_i32_0 : i32, i32
  }
  func.func @transform_18(%arg0: i32) -> (i32, i32, i32) {
    %c0_i32 = arith.constant 0 : i32
    %c0_i32_0 = arith.constant 0 : i32
    %c0_i32_1 = arith.constant 0 : i32
    return %arg0, %c0_i32, %c0_i32_0 : i32, i32, i32
  }
  func.func @transform_19(%arg0: i32) -> (i32, i32, i32) {
    %c0_i32 = arith.constant 0 : i32
    %c0_i32_0 = arith.constant 0 : i32
    %c0_i32_1 = arith.constant 0 : i32
    return %arg0, %c0_i32, %c0_i32_0 : i32, i32, i32
  }
}

</mosaic_0001>

<llo_original>
// kernel: tpu_custom_call.1
$region0: #{tpu_custom_call.1}
  #allocation0 [shape = 'u32[]', space=smem, size = 0x4, offset = 0x4, fixed_abs, tag = 'smem constant byte address 0x4 - core index']
  #allocation1 [shape = 'u32[72,128]{1,0:T(1,128)}', space=vmem, size = 0x9000, scoped, tag = 'internal scratch']
  %s0 = inlined_call_operand.hbm [shape: bf16[2,8,13], index: 0, kind: input, shape index: {}]
  %s1 = inlined_call_operand.vmem [shape: bf16[2,1,7], index: 1, kind: input, shape index: {}]
  %s2 = inlined_call_operand.hbm [shape: bf16[13,32], index: 2, kind: input, shape index: {}]
  %s3 = inlined_call_operand.hbm [shape: f32[1,32], index: 3, kind: input, shape index: {}]
  %s4 = inlined_call_operand.hbm [shape: bf16[7,32], index: 4, kind: input, shape index: {}]
  %s5 = inlined_call_operand.hbm [shape: f32[1,32], index: 5, kind: input, shape index: {}]
  %s6 = inlined_call_operand.vmem [shape: bf16[32,96], index: 6, kind: input, shape index: {}]
  %s7 = inlined_call_operand.hbm [shape: f32[1,96], index: 7, kind: input, shape index: {}]
  %s8 = inlined_call_operand.vmem [shape: bf16[32,32], index: 8, kind: input, shape index: {}]
  %s9 = inlined_call_operand.hbm [shape: f32[1,32], index: 9, kind: input, shape index: {}]
  %s10 = inlined_call_operand.hbm [shape: f32[1,32], index: 10, kind: input, shape index: {}]
  %s11 = inlined_call_operand.hbm [shape: f32[1,32], index: 11, kind: input, shape index: {}]
  %s12 = inlined_call_operand.vmem [shape: bf16[32,64], index: 12, kind: input, shape index: {}]
  %s13 = inlined_call_operand.hbm [shape: f32[1,64], index: 13, kind: input, shape index: {}]
  %s14 = inlined_call_operand.vmem [shape: bf16[64,32], index: 14, kind: input, shape index: {}]
  %s15 = inlined_call_operand.vmem [shape: f32[1,32], index: 15, kind: input, shape index: {}]
  %s16 = inlined_call_operand.vmem [shape: f32[1,32], index: 16, kind: input, shape index: {}]
  %s17 = inlined_call_operand.vmem [shape: f32[1,32], index: 17, kind: input, shape index: {}]
  %s18 = inlined_call_operand.hbm [shape: f32[2,16,32], index: 18, kind: output, shape index: {0}]
  %s19 = inlined_call_operand.hbm [shape: f32[2,16,32], index: 19, kind: output, shape index: {1}]
  %20 = xla_tuple %s18, %s19
  %s21 = sld [smem:[#allocation0]]
  $region153: #{tpu_custom_call.1} parent=0
    _
  %s23 = ssub.s32 1, %s21
  %s24 = scalar_select 0, %s23, %s21
  $region1: #{tpu_custom_call.1} parent=0
    #allocation2 [shape = 'u8[4096]{0}', space=vmem, size = 0x1000, scoped, tag = 'input window, operand 0']
    #allocation3 [shape = 's32[2]{0}', space=sflag, size = 0x8, scoped, tag = 'scoped memory for tpu_custom_call.1']
    #allocation4 [shape = 's32[2]{0}', space=sflag, size = 0x8, scoped, tag = 'scoped memory for tpu_custom_call.1']
    #allocation5 [shape = 'u8[4096]{0}', space=vmem, size = 0x1000, scoped, tag = 'input window, operand 2, single buffered']
    #allocation6 [shape = 's32[1]{0}', space=sflag, size = 0x4, scoped, tag = 'scoped memory for tpu_custom_call.1']
    #allocation7 [shape = 'u8[512]{0}', space=vmem, size = 0x400, scoped, tag = 'input window, operand 3, single buffered']
    #allocation8 [shape = 'u8[2048]{0}', space=vmem, size = 0x800, scoped, tag = 'input window, operand 4, single buffered']
    #allocation9 [shape = 's32[1]{0}', space=sflag, size = 0x4, scoped, tag = 'scoped memory for tpu_custom_call.1']
    #allocation10 [shape = 'u8[512]{0}', space=vmem, size = 0x400, scoped, tag = 'input window, operand 5, single buffered']
    #allocation11 [shape = 'u8[512]{0}', space=vmem, size = 0x400, scoped, tag = 'input window, operand 7, single buffered']
    #allocation12 [shape = 's32[1]{0}', space=sflag, size = 0x4, scoped, tag = 'scoped memory for tpu_custom_call.1']
    #allocation13 [shape = 'u8[512]{0}', space=vmem, size = 0x400, scoped, tag = 'input window, operand 9, single buffered']
    #allocation14 [shape = 'u8[512]{0}', space=vmem, size = 0x400, scoped, tag = 'input window, operand 10, single buffered']
    #allocation15 [shape = 's32[1]{0}', space=sflag, size = 0x4, scoped, tag = 'scoped memory for tpu_custom_call.1']
    #allocation16 [shape = 'u8[512]{0}', space=vmem, size = 0x400, scoped, tag = 'input window, operand 11, single buffered']
    #allocation17 [shape = 'u8[512]{0}', space=vmem, size = 0x400, scoped, tag = 'input window, operand 13, single buffered']
    #allocation18 [shape = 's32[1]{0}', space=sflag, size = 0x4, scoped, tag = 'scoped memory for tpu_custom_call.1']
    #allocation19 [shape = 'u8[16384]{0}', space=vmem, size = 0x4000, scoped, tag = 'output window, operand 0']
    #allocation20 [shape = 'u8[16384]{0}', space=vmem, size = 0x4000, scoped, tag = 'output window, operand 1']
    #allocation21 [shape = 's32[2]{0}', space=sflag, size = 0x8, scoped, tag = 'scoped memory for tpu_custom_call.1']
    %25 = vsyncpa [#allocation3], 0
    %s26 = scalar_lea.sflag [#allocation3], 1
    %27 = vsyncpa %s26, 0
    %28 = vsyncpa [#allocation6], 0
    %29 = vsyncpa [#allocation9], 0
    %30 = vsyncpa [#allocation12], 0
    %31 = vsyncpa [#allocation15], 0
    %32 = vsyncpa [#allocation18], 0
    %33 = vsyncpa [#allocation4], 0
    %s34 = scalar_lea.sflag [#allocation4], 1
    %35 = vsyncpa %s34, 0
    %36 = vsyncpa [#allocation21], 0
    %s37 = scalar_lea.sflag [#allocation21], 1
    %38 = vsyncpa %s37, 0
    loop: start=0, step=1, limit=4
    $region2: #{tpu_custom_call.1} parent=1 // loop_pre_header
      _
    $region3: #{tpu_custom_call.1} parent=1 // loop_header
      %s40 = sphi 0, %s44
      %p41 = scmp.ge.s32.totalorder %s40, 4
      %s50 = sphi 0, %s52
      %s53 = sphi 0, %s50
      %s54 = sphi 0, %s53
      %s70 = sphi 0, %s54
      %s76 = sphi 0, %s78
      %s79 = sphi 0, %s76
      %s80 = sphi 0, %s79
      %s96 = sphi 0, %s80
      %s100 = sphi 0, %s100
      %s102 = sphi 0, %s100
      %s103 = sphi 0, %s102
      %s117 = sphi 0, %s103
      %s121 = sphi 0, %s121
      %s123 = sphi 0, %s121
      %s124 = sphi 0, %s123
      %s138 = sphi 0, %s124
      %s142 = sphi 0, %s142
      %s144 = sphi 0, %s142
      %s145 = sphi 0, %s144
      %s159 = sphi 0, %s145
      %s163 = sphi 0, %s163
      %s165 = sphi 0, %s163
      %s166 = sphi 0, %s165
      %s180 = sphi 0, %s166
      %s184 = sphi 0, %s184
      %s186 = sphi 0, %s184
      %s187 = sphi 0, %s186
      %s201 = sphi 0, %s187
      %s205 = sphi 0, %s205
      %s207 = sphi 0, %s205
      %s208 = sphi 0, %s207
      %s222 = sphi 0, %s208
      %s226 = sphi 0, %s226
      %s228 = sphi 0, %s226
      %s229 = sphi 0, %s228
      %s243 = sphi 0, %s229
      %s247 = sphi 0, %s247
      %s249 = sphi 0, %s247
      %s250 = sphi 0, %s249
      %s264 = sphi 0, %s250
      %s268 = sphi 0, %s268
      %s270 = sphi 0, %s268
      %s271 = sphi 0, %s270
      %s285 = sphi 0, %s271
      %s289 = sphi 0, %s289
      %s291 = sphi 0, %s289
      %s292 = sphi 0, %s291
      %s306 = sphi 0, %s292
      %s310 = sphi 0, %s310
      %s312 = sphi 0, %s310
      %s313 = sphi 0, %s312
      %s327 = sphi 0, %s313
      %s331 = sphi 0, %s331
      %s333 = sphi 0, %s331
      %s334 = sphi 0, %s333
      %s348 = sphi 0, %s334
      %s352 = sphi 0, %s352
      %s354 = sphi 0, %s352
      %s355 = sphi 0, %s354
      %s369 = sphi 0, %s355
      %s373 = sphi 0, %s373
      %s375 = sphi 0, %s373
      %s376 = sphi 0, %s375
      %s390 = sphi 0, %s376
      %s394 = sphi 0, %s394
      %s396 = sphi 0, %s394
      %s397 = sphi 0, %s396
      %s411 = sphi 0, %s397
      %s415 = sphi 0, %s415
      %s417 = sphi 0, %s415
      %s418 = sphi 0, %s417
      %s432 = sphi 0, %s418
      %s438 = sphi 0, %s440
      %s441 = sphi 0, %s438
      %s442 = sphi 0, %s441
      %s458 = sphi 0, %s442
      %s464 = sphi 0, %s466
      %s467 = sphi 0, %s464
      %s468 = sphi 0, %s467
      %s484 = sphi 0, %s468
    $region4: #{tpu_custom_call.1} parent=1 // loop_header_branch
      %43 = sbr.rel (%p41) target = $region8
    $region5: #{tpu_custom_call.1} parent=1 // loop_body
      %s45 = ssub.s32 %s40, 1
      %s46 = ssub.s32 %s40, 2
      %s47 = sadd.s32 %s40, 1
      %s48 = ssub.s32 %s40, %s47
      %p49 = scmp.eq.s32.totalorder %s48, 0
      %s51 = sadd.s32 %s50, 1
      %s52 = scalar_select %p49, %s50, %s51
      %p55 = pneg %p49
      %p56 = scmp.eq.s32.totalorder %s40, 1
      %p57 = por %p55, %p56
      %p58 = scmp.ne.s32.totalorder %s50, %s53
      %p59 = scmp.eq.s32.totalorder %s40, 0
      %p60 = por %p58, %p59
      %p61 = scmp.ne.s32.totalorder %s50, %s53
      %p62 = scmp.eq.s32.totalorder %s45, 1
      %p63 = por %p61, %p62
      %p64 = scmp.ne.s32.totalorder %s53, %s54
      %p65 = scmp.eq.s32.totalorder %s45, 0
      %p66 = por %p64, %p65
      %p67 = scmp.ne.s32.totalorder %s53, %s54
      %p68 = scmp.eq.s32.totalorder %s46, 1
      %p69 = por %p67, %p68
      %p71 = scmp.ne.s32.totalorder %s54, %s70
      %p72 = scmp.eq.s32.totalorder %s46, 0
      %p73 = por %p71, %p72
      %s74 = ssub.s32 %s40, %s47
      %p75 = scmp.eq.s32.totalorder %s74, 0
      %s77 = sadd.s32 %s76, 1
      %s78 = scalar_select %p75, %s76, %s77
      %p81 = pneg %p75
      %p82 = scmp.eq.s32.totalorder %s40, 1
      %p83 = por %p81, %p82
      %p84 = scmp.ne.s32.totalorder %s76, %s79
      %p85 = scmp.eq.s32.totalorder %s40, 0
      %p86 = por %p84, %p85
      %p87 = scmp.ne.s32.totalorder %s76, %s79
      %p88 = scmp.eq.s32.totalorder %s45, 1
      %p89 = por %p87, %p88
      %p90 = scmp.ne.s32.totalorder %s79, %s80
      %p91 = scmp.eq.s32.totalorder %s45, 0
      %p92 = por %p90, %p91
      %p93 = scmp.ne.s32.totalorder %s79, %s80
      %p94 = scmp.eq.s32.totalorder %s46, 1
      %p95 = por %p93, %p94
      %p97 = scmp.ne.s32.totalorder %s80, %s96
      %p98 = scmp.eq.s32.totalorder %s46, 0
      %p99 = por %p97, %p98
      %s101 = sadd.s32 %s100, 1
      %p104 = scmp.eq.s32.totalorder %s40, 1
      %p105 = scmp.ne.s32.totalorder %s100, %s102
      %p106 = scmp.eq.s32.totalorder %s40, 0
      %p107 = por %p105, %p106
      %p108 = scmp.ne.s32.totalorder %s100, %s102
      %p109 = scmp.eq.s32.totalorder %s45, 1
      %p110 = por %p108, %p109
      %p111 = scmp.ne.s32.totalorder %s102, %s103
      %p112 = scmp.eq.s32.totalorder %s45, 0
      %p113 = por %p111, %p112
      %p114 = scmp.ne.s32.totalorder %s102, %s103
      %p115 = scmp.eq.s32.totalorder %s46, 1
      %p116 = por %p114, %p115
      %p118 = scmp.ne.s32.totalorder %s103, %s117
      %p119 = scmp.eq.s32.totalorder %s46, 0
      %p120 = por %p118, %p119
      %s122 = sadd.s32 %s121, 1
      %p125 = scmp.eq.s32.totalorder %s40, 1
      %p126 = scmp.ne.s32.totalorder %s121, %s123
      %p127 = scmp.eq.s32.totalorder %s40, 0
      %p128 = por %p126, %p127
      %p129 = scmp.ne.s32.totalorder %s121, %s123
      %p130 = scmp.eq.s32.totalorder %s45, 1
      %p131 = por %p129, %p130
      %p132 = scmp.ne.s32.totalorder %s123, %s124
      %p133 = scmp.eq.s32.totalorder %s45, 0
      %p134 = por %p132, %p133
      %p135 = scmp.ne.s32.totalorder %s123, %s124
      %p136 = scmp.eq.s32.totalorder %s46, 1
      %p137 = por %p135, %p136
      %p139 = scmp.ne.s32.totalorder %s124, %s138
      %p140 = scmp.eq.s32.totalorder %s46, 0
      %p141 = por %p139, %p140
      %s143 = sadd.s32 %s142, 1
      %p146 = scmp.eq.s32.totalorder %s40, 1
      %p147 = scmp.ne.s32.totalorder %s142, %s144
      %p148 = scmp.eq.s32.totalorder %s40, 0
      %p149 = por %p147, %p148
      %p150 = scmp.ne.s32.totalorder %s142, %s144
      %p151 = scmp.eq.s32.totalorder %s45, 1
      %p152 = por %p150, %p151
      %p153 = scmp.ne.s32.totalorder %s144, %s145
      %p154 = scmp.eq.s32.totalorder %s45, 0
      %p155 = por %p153, %p154
      %p156 = scmp.ne.s32.totalorder %s144, %s145
      %p157 = scmp.eq.s32.totalorder %s46, 1
      %p158 = por %p156, %p157
      %p160 = scmp.ne.s32.totalorder %s145, %s159
      %p161 = scmp.eq.s32.totalorder %s46, 0
      %p162 = por %p160, %p161
      %s164 = sadd.s32 %s163, 1
      %p167 = scmp.eq.s32.totalorder %s40, 1
      %p168 = scmp.ne.s32.totalorder %s163, %s165
      %p169 = scmp.eq.s32.totalorder %s40, 0
      %p170 = por %p168, %p169
      %p171 = scmp.ne.s32.totalorder %s163, %s165
      %p172 = scmp.eq.s32.totalorder %s45, 1
      %p173 = por %p171, %p172
      %p174 = scmp.ne.s32.totalorder %s165, %s166
      %p175 = scmp.eq.s32.totalorder %s45, 0
      %p176 = por %p174, %p175
      %p177 = scmp.ne.s32.totalorder %s165, %s166
      %p178 = scmp.eq.s32.totalorder %s46, 1
      %p179 = por %p177, %p178
      %p181 = scmp.ne.s32.totalorder %s166, %s180
      %p182 = scmp.eq.s32.totalorder %s46, 0
      %p183 = por %p181, %p182
      %s185 = sadd.s32 %s184, 1
      %p188 = scmp.eq.s32.totalorder %s40, 1
      %p189 = scmp.ne.s32.totalorder %s184, %s186
      %p190 = scmp.eq.s32.totalorder %s40, 0
      %p191 = por %p189, %p190
      %p192 = scmp.ne.s32.totalorder %s184, %s186
      %p193 = scmp.eq.s32.totalorder %s45, 1
      %p194 = por %p192, %p193
      %p195 = scmp.ne.s32.totalorder %s186, %s187
      %p196 = scmp.eq.s32.totalorder %s45, 0
      %p197 = por %p195, %p196
      %p198 = scmp.ne.s32.totalorder %s186, %s187
      %p199 = scmp.eq.s32.totalorder %s46, 1
      %p200 = por %p198, %p199
      %p202 = scmp.ne.s32.totalorder %s187, %s201
      %p203 = scmp.eq.s32.totalorder %s46, 0
      %p204 = por %p202, %p203
      %s206 = sadd.s32 %s205, 1
      %p209 = scmp.eq.s32.totalorder %s40, 1
      %p210 = scmp.ne.s32.totalorder %s205, %s207
      %p211 = scmp.eq.s32.totalorder %s40, 0
      %p212 = por %p210, %p211
      %p213 = scmp.ne.s32.totalorder %s205, %s207
      %p214 = scmp.eq.s32.totalorder %s45, 1
      %p215 = por %p213, %p214
      %p216 = scmp.ne.s32.totalorder %s207, %s208
      %p217 = scmp.eq.s32.totalorder %s45, 0
      %p218 = por %p216, %p217
      %p219 = scmp.ne.s32.totalorder %s207, %s208
      %p220 = scmp.eq.s32.totalorder %s46, 1
      %p221 = por %p219, %p220
      %p223 = scmp.ne.s32.totalorder %s208, %s222
      %p224 = scmp.eq.s32.totalorder %s46, 0
      %p225 = por %p223, %p224
      %s227 = sadd.s32 %s226, 1
      %p230 = scmp.eq.s32.totalorder %s40, 1
      %p231 = scmp.ne.s32.totalorder %s226, %s228
      %p232 = scmp.eq.s32.totalorder %s40, 0
      %p233 = por %p231, %p232
      %p234 = scmp.ne.s32.totalorder %s226, %s228
      %p235 = scmp.eq.s32.totalorder %s45, 1
      %p236 = por %p234, %p235
      %p237 = scmp.ne.s32.totalorder %s228, %s229
      %p238 = scmp.eq.s32.totalorder %s45, 0
      %p239 = por %p237, %p238
      %p240 = scmp.ne.s32.totalorder %s228, %s229
      %p241 = scmp.eq.s32.totalorder %s46, 1
      %p242 = por %p240, %p241
      %p244 = scmp.ne.s32.totalorder %s229, %s243
      %p245 = scmp.eq.s32.totalorder %s46, 0
      %p246 = por %p244, %p245
      %s248 = sadd.s32 %s247, 1
      %p251 = scmp.eq.s32.totalorder %s40, 1
      %p252 = scmp.ne.s32.totalorder %s247, %s249
      %p253 = scmp.eq.s32.totalorder %s40, 0
      %p254 = por %p252, %p253
      %p255 = scmp.ne.s32.totalorder %s247, %s249
      %p256 = scmp.eq.s32.totalorder %s45, 1
      %p257 = por %p255, %p256
      %p258 = scmp.ne.s32.totalorder %s249, %s250
      %p259 = scmp.eq.s32.totalorder %s45, 0
      %p260 = por %p258, %p259
      %p261 = scmp.ne.s32.totalorder %s249, %s250
      %p262 = scmp.eq.s32.totalorder %s46, 1
      %p263 = por %p261, %p262
      %p265 = scmp.ne.s32.totalorder %s250, %s264
      %p266 = scmp.eq.s32.totalorder %s46, 0
      %p267 = por %p265, %p266
      %s269 = sadd.s32 %s268, 1
      %p272 = scmp.eq.s32.totalorder %s40, 1
      %p273 = scmp.ne.s32.totalorder %s268, %s270
      %p274 = scmp.eq.s32.totalorder %s40, 0
      %p275 = por %p273, %p274
      %p276 = scmp.ne.s32.totalorder %s268, %s270
      %p277 = scmp.eq.s32.totalorder %s45, 1
      %p278 = por %p276, %p277
      %p279 = scmp.ne.s32.totalorder %s270, %s271
      %p280 = scmp.eq.s32.totalorder %s45, 0
      %p281 = por %p279, %p280
      %p282 = scmp.ne.s32.totalorder %s270, %s271
      %p283 = scmp.eq.s32.totalorder %s46, 1
      %p284 = por %p282, %p283
      %p286 = scmp.ne.s32.totalorder %s271, %s285
      %p287 = scmp.eq.s32.totalorder %s46, 0
      %p288 = por %p286, %p287
      %s290 = sadd.s32 %s289, 1
      %p293 = scmp.eq.s32.totalorder %s40, 1
      %p294 = scmp.ne.s32.totalorder %s289, %s291
      %p295 = scmp.eq.s32.totalorder %s40, 0
      %p296 = por %p294, %p295
      %p297 = scmp.ne.s32.totalorder %s289, %s291
      %p298 = scmp.eq.s32.totalorder %s45, 1
      %p299 = por %p297, %p298
      %p300 = scmp.ne.s32.totalorder %s291, %s292
      %p301 = scmp.eq.s32.totalorder %s45, 0
      %p302 = por %p300, %p301
      %p303 = scmp.ne.s32.totalorder %s291, %s292
      %p304 = scmp.eq.s32.totalorder %s46, 1
      %p305 = por %p303, %p304
      %p307 = scmp.ne.s32.totalorder %s292, %s306
      %p308 = scmp.eq.s32.totalorder %s46, 0
      %p309 = por %p307, %p308
      %s311 = sadd.s32 %s310, 1
      %p314 = scmp.eq.s32.totalorder %s40, 1
      %p315 = scmp.ne.s32.totalorder %s310, %s312
      %p316 = scmp.eq.s32.totalorder %s40, 0
      %p317 = por %p315, %p316
      %p318 = scmp.ne.s32.totalorder %s310, %s312
      %p319 = scmp.eq.s32.totalorder %s45, 1
      %p320 = por %p318, %p319
      %p321 = scmp.ne.s32.totalorder %s312, %s313
      %p322 = scmp.eq.s32.totalorder %s45, 0
      %p323 = por %p321, %p322
      %p324 = scmp.ne.s32.totalorder %s312, %s313
      %p325 = scmp.eq.s32.totalorder %s46, 1
      %p326 = por %p324, %p325
      %p328 = scmp.ne.s32.totalorder %s313, %s327
      %p329 = scmp.eq.s32.totalorder %s46, 0
      %p330 = por %p328, %p329
      %s332 = sadd.s32 %s331, 1
      %p335 = scmp.eq.s32.totalorder %s40, 1
      %p336 = scmp.ne.s32.totalorder %s331, %s333
      %p337 = scmp.eq.s32.totalorder %s40, 0
      %p338 = por %p336, %p337
      %p339 = scmp.ne.s32.totalorder %s331, %s333
      %p340 = scmp.eq.s32.totalorder %s45, 1
      %p341 = por %p339, %p340
      %p342 = scmp.ne.s32.totalorder %s333, %s334
      %p343 = scmp.eq.s32.totalorder %s45, 0
      %p344 = por %p342, %p343
      %p345 = scmp.ne.s32.totalorder %s333, %s334
      %p346 = scmp.eq.s32.totalorder %s46, 1
      %p347 = por %p345, %p346
      %p349 = scmp.ne.s32.totalorder %s334, %s348
      %p350 = scmp.eq.s32.totalorder %s46, 0
      %p351 = por %p349, %p350
      %s353 = sadd.s32 %s352, 1
      %p356 = scmp.eq.s32.totalorder %s40, 1
      %p357 = scmp.ne.s32.totalorder %s352, %s354
      %p358 = scmp.eq.s32.totalorder %s40, 0
      %p359 = por %p357, %p358
      %p360 = scmp.ne.s32.totalorder %s352, %s354
      %p361 = scmp.eq.s32.totalorder %s45, 1
      %p362 = por %p360, %p361
      %p363 = scmp.ne.s32.totalorder %s354, %s355
      %p364 = scmp.eq.s32.totalorder %s45, 0
      %p365 = por %p363, %p364
      %p366 = scmp.ne.s32.totalorder %s354, %s355
      %p367 = scmp.eq.s32.totalorder %s46, 1
      %p368 = por %p366, %p367
      %p370 = scmp.ne.s32.totalorder %s355, %s369
      %p371 = scmp.eq.s32.totalorder %s46, 0
      %p372 = por %p370, %p371
      %s374 = sadd.s32 %s373, 1
      %p377 = scmp.eq.s32.totalorder %s40, 1
      %p378 = scmp.ne.s32.totalorder %s373, %s375
      %p379 = scmp.eq.s32.totalorder %s40, 0
      %p380 = por %p378, %p379
      %p381 = scmp.ne.s32.totalorder %s373, %s375
      %p382 = scmp.eq.s32.totalorder %s45, 1
      %p383 = por %p381, %p382
      %p384 = scmp.ne.s32.totalorder %s375, %s376
      %p385 = scmp.eq.s32.totalorder %s45, 0
      %p386 = por %p384, %p385
      %p387 = scmp.ne.s32.totalorder %s375, %s376
      %p388 = scmp.eq.s32.totalorder %s46, 1
      %p389 = por %p387, %p388
      %p391 = scmp.ne.s32.totalorder %s376, %s390
      %p392 = scmp.eq.s32.totalorder %s46, 0
      %p393 = por %p391, %p392
      %s395 = sadd.s32 %s394, 1
      %p398 = scmp.eq.s32.totalorder %s40, 1
      %p399 = scmp.ne.s32.totalorder %s394, %s396
      %p400 = scmp.eq.s32.totalorder %s40, 0
      %p401 = por %p399, %p400
      %p402 = scmp.ne.s32.totalorder %s394, %s396
      %p403 = scmp.eq.s32.totalorder %s45, 1
      %p404 = por %p402, %p403
      %p405 = scmp.ne.s32.totalorder %s396, %s397
      %p406 = scmp.eq.s32.totalorder %s45, 0
      %p407 = por %p405, %p406
      %p408 = scmp.ne.s32.totalorder %s396, %s397
      %p409 = scmp.eq.s32.totalorder %s46, 1
      %p410 = por %p408, %p409
      %p412 = scmp.ne.s32.totalorder %s397, %s411
      %p413 = scmp.eq.s32.totalorder %s46, 0
      %p414 = por %p412, %p413
      %s416 = sadd.s32 %s415, 1
      %p419 = scmp.eq.s32.totalorder %s40, 1
      %p420 = scmp.ne.s32.totalorder %s415, %s417
      %p421 = scmp.eq.s32.totalorder %s40, 0
      %p422 = por %p420, %p421
      %p423 = scmp.ne.s32.totalorder %s415, %s417
      %p424 = scmp.eq.s32.totalorder %s45, 1
      %p425 = por %p423, %p424
      %p426 = scmp.ne.s32.totalorder %s417, %s418
      %p427 = scmp.eq.s32.totalorder %s45, 0
      %p428 = por %p426, %p427
      %p429 = scmp.ne.s32.totalorder %s417, %s418
      %p430 = scmp.eq.s32.totalorder %s46, 1
      %p431 = por %p429, %p430
      %p433 = scmp.ne.s32.totalorder %s418, %s432
      %p434 = scmp.eq.s32.totalorder %s46, 0
      %p435 = por %p433, %p434
      %s436 = ssub.s32 %s40, %s47
      %p437 = scmp.eq.s32.totalorder %s436, 0
      %s439 = sadd.s32 %s438, 1
      %s440 = scalar_select %p437, %s438, %s439
      %p443 = pneg %p437
      %p444 = scmp.eq.s32.totalorder %s40, 1
      %p445 = por %p443, %p444
      %p446 = scmp.ne.s32.totalorder %s438, %s441
      %p447 = scmp.eq.s32.totalorder %s40, 0
      %p448 = por %p446, %p447
      %p449 = scmp.ne.s32.totalorder %s438, %s441
      %p450 = scmp.eq.s32.totalorder %s45, 1
      %p451 = por %p449, %p450
      %p452 = scmp.ne.s32.totalorder %s441, %s442
      %p453 = scmp.eq.s32.totalorder %s45, 0
      %p454 = por %p452, %p453
      %p455 = scmp.ne.s32.totalorder %s441, %s442
      %p456 = scmp.eq.s32.totalorder %s46, 1
      %p457 = por %p455, %p456
      %p459 = scmp.ne.s32.totalorder %s442, %s458
      %p460 = scmp.eq.s32.totalorder %s46, 0
      %p461 = por %p459, %p460
      %s462 = ssub.s32 %s40, %s47
      %p463 = scmp.eq.s32.totalorder %s462, 0
      %s465 = sadd.s32 %s464, 1
      %s466 = scalar_select %p463, %s464, %s465
      %p469 = pneg %p463
      %p470 = scmp.eq.s32.totalorder %s40, 1
      %p471 = por %p469, %p470
      %p472 = scmp.ne.s32.totalorder %s464, %s467
      %p473 = scmp.eq.s32.totalorder %s40, 0
      %p474 = por %p472, %p473
      %p475 = scmp.ne.s32.totalorder %s464, %s467
      %p476 = scmp.eq.s32.totalorder %s45, 1
      %p477 = por %p475, %p476
      %p478 = scmp.ne.s32.totalorder %s467, %s468
      %p479 = scmp.eq.s32.totalorder %s45, 0
      %p480 = por %p478, %p479
      %p481 = scmp.ne.s32.totalorder %s467, %s468
      %p482 = scmp.eq.s32.totalorder %s46, 1
      %p483 = por %p481, %p482
      %p485 = scmp.ne.s32.totalorder %s468, %s484
      %p486 = scmp.eq.s32.totalorder %s46, 0
      %p487 = por %p485, %p486
      %p488 = scmp.le.s32.totalorder 1, %s40
      %p489 = scmp.lt.s32.totalorder %s40, 3
      %p490 = pnand %p488, %p489
      %p491 = pneg %p490
      // Predicated region
      $region9: #{tpu_custom_call.1} parent=5 // pred_check
        _
      $region10: #{tpu_custom_call.1} parent=5 // pred_check_branch
        %493 = sbr.rel (%p490) target = $region12
      $region11: #{tpu_custom_call.1} parent=5 // pred_region
        %s494 = ssub.s32 %s40, 1
        // Predicated region
        $region13: #{tpu_custom_call.1} parent=11 // pred_check
          %p495 = pneg %p113
        $region14: #{tpu_custom_call.1} parent=11 // pred_check_branch
          %497 = sbr.rel (%p495) target = $region16
        $region15: #{tpu_custom_call.1} parent=11 // pred_region
          %499 = vsyncadd [#allocation6], 0
          %s500 = sshll.u32 %s2, 4
          %s501 = int_to_ptr.hbm [resolvable:$true] %s500
          %s502 = sshll.u32 [#allocation5], 4
          %s503 = int_to_ptr.vmem [resolvable:$true] %s502
          %508 = dma.hbm_to_vmem [thread:$0]  %s501, 128, %s503, [#allocation6], 64, 64, 4
        $region16: #{tpu_custom_call.1} parent=11 // pred_fallthru
          _
        // Predicated region
        $region17: #{tpu_custom_call.1} parent=11 // pred_check
          %p509 = pneg %p134
        $region18: #{tpu_custom_call.1} parent=11 // pred_check_branch
          %511 = sbr.rel (%p509) target = $region20
        $region19: #{tpu_custom_call.1} parent=11 // pred_region
          %513 = vsyncadd [#allocation6], 0
          %s515 = sshll.u32 %s3, 4
          %s516 = int_to_ptr.hbm [resolvable:$true] %s515
          %s517 = sshll.u32 [#allocation7], 4
          %s518 = int_to_ptr.vmem [resolvable:$true] %s517
          %520 = dma.hbm_to_vmem [thread:$0]  %s516, 16, %s518, [#allocation6]
        $region20: #{tpu_custom_call.1} parent=11 // pred_fallthru
          _
        // Predicated region
        $region21: #{tpu_custom_call.1} parent=11 // pred_check
          %p521 = pneg %p155
        $region22: #{tpu_custom_call.1} parent=11 // pred_check_branch
          %523 = sbr.rel (%p521) target = $region24
        $region23: #{tpu_custom_call.1} parent=11 // pred_region
          %525 = vsyncadd [#allocation9], 0
          %s527 = sshll.u32 %s4, 4
          %s528 = int_to_ptr.hbm [resolvable:$true] %s527
          %s529 = sshll.u32 [#allocation8], 4
          %s530 = int_to_ptr.vmem [resolvable:$true] %s529
          %532 = dma.hbm_to_vmem [thread:$0]  %s528, 64, %s530, [#allocation9]
        $region24: #{tpu_custom_call.1} parent=11 // pred_fallthru
          _
        // Predicated region
        $region25: #{tpu_custom_call.1} parent=11 // pred_check
          %p533 = pneg %p176
        $region26: #{tpu_custom_call.1} parent=11 // pred_check_branch
          %535 = sbr.rel (%p533) target = $region28
        $region27: #{tpu_custom_call.1} parent=11 // pred_region
          %537 = vsyncadd [#allocation9], 0
          %s539 = sshll.u32 %s5, 4
          %s540 = int_to_ptr.hbm [resolvable:$true] %s539
          %s541 = sshll.u32 [#allocation10], 4
          %s542 = int_to_ptr.vmem [resolvable:$true] %s541
          %544 = dma.hbm_to_vmem [thread:$0]  %s540, 16, %s542, [#allocation9]
        $region28: #{tpu_custom_call.1} parent=11 // pred_fallthru
          _
        // Predicated region
        $region29: #{tpu_custom_call.1} parent=11 // pred_check
          %p545 = pneg %p197
        $region30: #{tpu_custom_call.1} parent=11 // pred_check_branch
          %547 = sbr.rel (%p545) target = $region32
        $region31: #{tpu_custom_call.1} parent=11 // pred_region
          _
        $region32: #{tpu_custom_call.1} parent=11 // pred_fallthru
          _
        // Predicated region
        $region33: #{tpu_custom_call.1} parent=11 // pred_check
          %p548 = pneg %p218
        $region34: #{tpu_custom_call.1} parent=11 // pred_check_branch
          %550 = sbr.rel (%p548) target = $region36
        $region35: #{tpu_custom_call.1} parent=11 // pred_region
          %552 = vsyncadd [#allocation12], 0
          %s554 = sshll.u32 %s7, 4
          %s555 = int_to_ptr.hbm [resolvable:$true] %s554
          %s556 = sshll.u32 [#allocation11], 4
          %s557 = int_to_ptr.vmem [resolvable:$true] %s556
          %559 = dma.hbm_to_vmem [thread:$0]  %s555, 16, %s557, [#allocation12]
        $region36: #{tpu_custom_call.1} parent=11 // pred_fallthru
          _
        // Predicated region
        $region37: #{tpu_custom_call.1} parent=11 // pred_check
          %p560 = pneg %p239
        $region38: #{tpu_custom_call.1} parent=11 // pred_check_branch
          %562 = sbr.rel (%p560) target = $region40
        $region39: #{tpu_custom_call.1} parent=11 // pred_region
          _
        $region40: #{tpu_custom_call.1} parent=11 // pred_fallthru
          _
        // Predicated region
        $region41: #{tpu_custom_call.1} parent=11 // pred_check
          %p563 = pneg %p260
        $region42: #{tpu_custom_call.1} parent=11 // pred_check_branch
          %565 = sbr.rel (%p563) target = $region44
        $region43: #{tpu_custom_call.1} parent=11 // pred_region
          %567 = vsyncadd [#allocation12], 0
          %s569 = sshll.u32 %s9, 4
          %s570 = int_to_ptr.hbm [resolvable:$true] %s569
          %s571 = sshll.u32 [#allocation13], 4
          %s572 = int_to_ptr.vmem [resolvable:$true] %s571
          %574 = dma.hbm_to_vmem [thread:$0]  %s570, 16, %s572, [#allocation12]
        $region44: #{tpu_custom_call.1} parent=11 // pred_fallthru
          _
        // Predicated region
        $region45: #{tpu_custom_call.1} parent=11 // pred_check
          %p575 = pneg %p281
        $region46: #{tpu_custom_call.1} parent=11 // pred_check_branch
          %577 = sbr.rel (%p575) target = $region48
        $region47: #{tpu_custom_call.1} parent=11 // pred_region
          %579 = vsyncadd [#allocation15], 0
          %s581 = sshll.u32 %s10, 4
          %s582 = int_to_ptr.hbm [resolvable:$true] %s581
          %s583 = sshll.u32 [#allocation14], 4
          %s584 = int_to_ptr.vmem [resolvable:$true] %s583
          %586 = dma.hbm_to_vmem [thread:$0]  %s582, 16, %s584, [#allocation15]
        $region48: #{tpu_custom_call.1} parent=11 // pred_fallthru
          _
        // Predicated region
        $region49: #{tpu_custom_call.1} parent=11 // pred_check
          %p587 = pneg %p302
        $region50: #{tpu_custom_call.1} parent=11 // pred_check_branch
          %589 = sbr.rel (%p587) target = $region52
        $region51: #{tpu_custom_call.1} parent=11 // pred_region
          %591 = vsyncadd [#allocation15], 0
          %s593 = sshll.u32 %s11, 4
          %s594 = int_to_ptr.hbm [resolvable:$true] %s593
          %s595 = sshll.u32 [#allocation16], 4
          %s596 = int_to_ptr.vmem [resolvable:$true] %s595
          %598 = dma.hbm_to_vmem [thread:$0]  %s594, 16, %s596, [#allocation15]
        $region52: #{tpu_custom_call.1} parent=11 // pred_fallthru
          _
        // Predicated region
        $region53: #{tpu_custom_call.1} parent=11 // pred_check
          %p599 = pneg %p323
        $region54: #{tpu_custom_call.1} parent=11 // pred_check_branch
          %601 = sbr.rel (%p599) target = $region56
        $region55: #{tpu_custom_call.1} parent=11 // pred_region
          _
        $region56: #{tpu_custom_call.1} parent=11 // pred_fallthru
          _
        // Predicated region
        $region57: #{tpu_custom_call.1} parent=11 // pred_check
          %p602 = pneg %p344
        $region58: #{tpu_custom_call.1} parent=11 // pred_check_branch
          %604 = sbr.rel (%p602) target = $region60
        $region59: #{tpu_custom_call.1} parent=11 // pred_region
          %606 = vsyncadd [#allocation18], 0
          %s608 = sshll.u32 %s13, 4
          %s609 = int_to_ptr.hbm [resolvable:$true] %s608
          %s610 = sshll.u32 [#allocation17], 4
          %s611 = int_to_ptr.vmem [resolvable:$true] %s610
          %613 = dma.hbm_to_vmem [thread:$0]  %s609, 16, %s611, [#allocation18]
        $region60: #{tpu_custom_call.1} parent=11 // pred_fallthru
          _
        // Predicated region
        $region61: #{tpu_custom_call.1} parent=11 // pred_check
          %p614 = pneg %p365
        $region62: #{tpu_custom_call.1} parent=11 // pred_check_branch
          %616 = sbr.rel (%p614) target = $region64
        $region63: #{tpu_custom_call.1} parent=11 // pred_region
          _
        $region64: #{tpu_custom_call.1} parent=11 // pred_fallthru
          _
        // Predicated region
        $region65: #{tpu_custom_call.1} parent=11 // pred_check
          %p617 = pneg %p386
        $region66: #{tpu_custom_call.1} parent=11 // pred_check_branch
          %619 = sbr.rel (%p617) target = $region68
        $region67: #{tpu_custom_call.1} parent=11 // pred_region
          _
        $region68: #{tpu_custom_call.1} parent=11 // pred_fallthru
          _
        // Predicated region
        $region69: #{tpu_custom_call.1} parent=11 // pred_check
          %p620 = pneg %p407
        $region70: #{tpu_custom_call.1} parent=11 // pred_check_branch
          %622 = sbr.rel (%p620) target = $region72
        $region71: #{tpu_custom_call.1} parent=11 // pred_region
          _
        $region72: #{tpu_custom_call.1} parent=11 // pred_fallthru
          _
        // Predicated region
        $region73: #{tpu_custom_call.1} parent=11 // pred_check
          %p623 = pneg %p428
        $region74: #{tpu_custom_call.1} parent=11 // pred_check_branch
          %625 = sbr.rel (%p623) target = $region76
        $region75: #{tpu_custom_call.1} parent=11 // pred_region
          _
        $region76: #{tpu_custom_call.1} parent=11 // pred_fallthru
          _
      $region12: #{tpu_custom_call.1} parent=5 // pred_fallthru
        _
      %p626 = scmp.lt.s32.totalorder %s40, 2
      // Predicated region
      $region77: #{tpu_custom_call.1} parent=5 // pred_check
        %p627 = pneg %p626
      $region78: #{tpu_custom_call.1} parent=5 // pred_check_branch
        %629 = sbr.rel (%p627) target = $region80
      $region79: #{tpu_custom_call.1} parent=5 // pred_region
        // Predicated region
        $region81: #{tpu_custom_call.1} parent=79 // pred_check
          %p630 = pneg %p60
        $region82: #{tpu_custom_call.1} parent=79 // pred_check_branch
          %632 = sbr.rel (%p630) target = $region84
        $region83: #{tpu_custom_call.1} parent=79 // pred_region
          %s633 = sand.u32 %s50, 1
          %s634 = scalar_lea.sflag [#allocation3], %s633
          %s635 = sand.u32 %s50, 1
          %s636 = smul.addr %s635, 4
          %s637 = scalar_lea.vmem [#allocation2], %s636
          %639 = vsyncadd %s634, 0
          %s640 = smul.addr %s40, 4
          %s641 = scalar_lea.hbm %s0, %s640
          %s643 = sshll.u32 %s641, 4
          %s644 = int_to_ptr.hbm [resolvable:$true] %s643
          %s645 = sshll.u32 %s637, 4
          %s646 = int_to_ptr.vmem [resolvable:$true] %s645
          %648 = dma.hbm_to_vmem [thread:$0]  %s644, 64, %s646, %s634
        $region84: #{tpu_custom_call.1} parent=79 // pred_fallthru
          _
        // Predicated region
        $region85: #{tpu_custom_call.1} parent=79 // pred_check
          %p649 = pneg %p86
        $region86: #{tpu_custom_call.1} parent=79 // pred_check_branch
          %651 = sbr.rel (%p649) target = $region88
        $region87: #{tpu_custom_call.1} parent=79 // pred_region
          %p652 = scmp.lt.s32.totalorder %s40, 1
          %s653 = scalar_select %p652, %s40, 1
          %s654 = scalar_lea.vmem %s1, %s653
        $region88: #{tpu_custom_call.1} parent=79 // pred_fallthru
          _
      $region80: #{tpu_custom_call.1} parent=5 // pred_fallthru
        _
      %p655 = scmp.le.s32.totalorder 1, %s40
      %p656 = scmp.lt.s32.totalorder %s40, 3
      %p657 = pnand %p655, %p656
      %p658 = pneg %p657
      // Predicated region
      $region89: #{tpu_custom_call.1} parent=5 // pred_check
        _
      $region90: #{tpu_custom_call.1} parent=5 // pred_check_branch
        %660 = sbr.rel (%p657) target = $region92
      $region91: #{tpu_custom_call.1} parent=5 // pred_region
        %s661 = ssub.s32 %s40, 1
        %s662 = sand.u32 %s53, 1
        %s663 = scalar_lea.sflag [#allocation3], %s662
        %s664 = sand.u32 %s53, 1
        %s665 = smul.addr %s664, 4
        %s666 = scalar_lea.vmem [#allocation2], %s665
        // Predicated region
        $region93: #{tpu_custom_call.1} parent=91 // pred_check
          %p667 = pneg %p66
        $region94: #{tpu_custom_call.1} parent=91 // pred_check_branch
          %669 = sbr.rel (%p667) target = $region96
        $region95: #{tpu_custom_call.1} parent=91 // pred_region
          %671 = dma.done %s663, 64
        $region96: #{tpu_custom_call.1} parent=91 // pred_fallthru
          _
        // Predicated region
        $region97: #{tpu_custom_call.1} parent=91 // pred_check
          %p672 = pneg %p113
        $region98: #{tpu_custom_call.1} parent=91 // pred_check_branch
          %674 = sbr.rel (%p672) target = $region100
        $region99: #{tpu_custom_call.1} parent=91 // pred_region
          %676 = dma.done [#allocation6], 128
        $region100: #{tpu_custom_call.1} parent=91 // pred_fallthru
          _
        // Predicated region
        $region101: #{tpu_custom_call.1} parent=91 // pred_check
          %p677 = pneg %p134
        $region102: #{tpu_custom_call.1} parent=91 // pred_check_branch
          %679 = sbr.rel (%p677) target = $region104
        $region103: #{tpu_custom_call.1} parent=91 // pred_region
          %681 = dma.done [#allocation6], 16
        $region104: #{tpu_custom_call.1} parent=91 // pred_fallthru
          _
        // Predicated region
        $region105: #{tpu_custom_call.1} parent=91 // pred_check
          %p682 = pneg %p155
        $region106: #{tpu_custom_call.1} parent=91 // pred_check_branch
          %684 = sbr.rel (%p682) target = $region108
        $region107: #{tpu_custom_call.1} parent=91 // pred_region
          %686 = dma.done [#allocation9], 64
        $region108: #{tpu_custom_call.1} parent=91 // pred_fallthru
          _
        // Predicated region
        $region109: #{tpu_custom_call.1} parent=91 // pred_check
          %p687 = pneg %p176
        $region110: #{tpu_custom_call.1} parent=91 // pred_check_branch
          %689 = sbr.rel (%p687) target = $region112
        $region111: #{tpu_custom_call.1} parent=91 // pred_region
          %691 = dma.done [#allocation9], 16
        $region112: #{tpu_custom_call.1} parent=91 // pred_fallthru
          _
        // Predicated region
        $region113: #{tpu_custom_call.1} parent=91 // pred_check
          %p692 = pneg %p218
        $region114: #{tpu_custom_call.1} parent=91 // pred_check_branch
          %694 = sbr.rel (%p692) target = $region116
        $region115: #{tpu_custom_call.1} parent=91 // pred_region
          %696 = dma.done [#allocation12], 16
        $region116: #{tpu_custom_call.1} parent=91 // pred_fallthru
          _
        // Predicated region
        $region117: #{tpu_custom_call.1} parent=91 // pred_check
          %p697 = pneg %p260
        $region118: #{tpu_custom_call.1} parent=91 // pred_check_branch
          %699 = sbr.rel (%p697) target = $region120
        $region119: #{tpu_custom_call.1} parent=91 // pred_region
          %701 = dma.done [#allocation12], 16
        $region120: #{tpu_custom_call.1} parent=91 // pred_fallthru
          _
        // Predicated region
        $region121: #{tpu_custom_call.1} parent=91 // pred_check
          %p702 = pneg %p281
        $region122: #{tpu_custom_call.1} parent=91 // pred_check_branch
          %704 = sbr.rel (%p702) target = $region124
        $region123: #{tpu_custom_call.1} parent=91 // pred_region
          %706 = dma.done [#allocation15], 16
        $region124: #{tpu_custom_call.1} parent=91 // pred_fallthru
          _
        // Predicated region
        $region125: #{tpu_custom_call.1} parent=91 // pred_check
          %p707 = pneg %p302
        $region126: #{tpu_custom_call.1} parent=91 // pred_check_branch
          %709 = sbr.rel (%p707) target = $region128
        $region127: #{tpu_custom_call.1} parent=91 // pred_region
          %711 = dma.done [#allocation15], 16
        $region128: #{tpu_custom_call.1} parent=91 // pred_fallthru
          _
        // Predicated region
        $region129: #{tpu_custom_call.1} parent=91 // pred_check
          %p712 = pneg %p344
        $region130: #{tpu_custom_call.1} parent=91 // pred_check_branch
          %714 = sbr.rel (%p712) target = $region132
        $region131: #{tpu_custom_call.1} parent=91 // pred_region
          %716 = dma.done [#allocation18], 16
        $region132: #{tpu_custom_call.1} parent=91 // pred_fallthru
          _
        %s717 = sand.u32 %s53, 1
        %s718 = scalar_lea.sflag [#allocation3], %s717
        %s719 = sand.u32 %s53, 1
        %s720 = smul.addr %s719, 4
        %s721 = scalar_lea.vmem [#allocation2], %s720
        %p722 = pneg %p66
        %p723 = pneg %p63
        %p724 = scmp.lt.s32.totalorder %s45, 1
        %s725 = scalar_select %p724, %s45, 1
        %s726 = scalar_lea.vmem %s1, %s725
        %p727 = pneg %p92
        %p728 = pneg %p89
        %p729 = pneg %p113
        %p730 = pneg %p110
        %p731 = pneg %p134
        %p732 = pneg %p131
        %p733 = pneg %p155
        %p734 = pneg %p152
        %p735 = pneg %p176
        %p736 = pneg %p173
        %p737 = pneg %p197
        %p738 = pneg %p194
        %p739 = pneg %p218
        %p740 = pneg %p215
        %p741 = pneg %p239
        %p742 = pneg %p236
        %p743 = pneg %p260
        %p744 = pneg %p257
        %p745 = pneg %p281
        %p746 = pneg %p278
        %p747 = pneg %p302
        %p748 = pneg %p299
        %p749 = pneg %p323
        %p750 = pneg %p320
        %p751 = pneg %p344
        %p752 = pneg %p341
        %p753 = pneg %p365
        %p754 = pneg %p362
        %p755 = pneg %p386
        %p756 = pneg %p383
        %p757 = pneg %p407
        %p758 = pneg %p404
        %p759 = pneg %p428
        %p760 = pneg %p425
        %p761 = pneg %p454
        %p762 = pneg %p451
        %s763 = sand.u32 %s441, 1
        %s764 = scalar_lea.sflag [#allocation4], %s763
        %s765 = sand.u32 %s441, 1
        %s766 = smul.addr %s765, 16
        %s767 = scalar_lea.vmem [#allocation19], %s766
        %p768 = pneg %p480
        %p769 = pneg %p477
        %s770 = sand.u32 %s467, 1
        %s771 = scalar_lea.sflag [#allocation21], %s770
        %s772 = sand.u32 %s467, 1
        %s773 = smul.addr %s772, 16
        %s774 = scalar_lea.vmem [#allocation20], %s773
        %p775 = scmp.lt.s32.totalorder %s45, 1
        %s776 = scalar_select %p775, %s45, 1
        %s777 = scalar_lea.vmem %s1, %s776
        %v779 = vld [vmem:[%s666] sm:$0xf]
        %v780 = vld [vmem:[#allocation5] sm:$0xf]
        %v781 = vld [vmem:[#allocation5 + $0x4] sm:$0x7]
        %v782 = vld [vmem:[#allocation7] sm:$0x1]
        %v784 = vperm.slane %v782, 0
        %v788 = vunpack.c.l.b16 %v780
        %v789 = vunpack.c.l.b16 %v781
        %v790 = vpack.c.b16 %v789, %v788
        %vm791 = vcmask 105472
        %v793 = vsel %vm791, %v779, 0
        %vm795 = vcmask 1045504
        %vm796 = vcmask 1046528
        %v797 = vsel %vm795, 4294967295, 65535
        %v798 = vsel %vm796, %v797, 0
        %v800 = vand.u32 %v790, %v798
        %802 = vmatpush.bf16.msra.mxu0 0
        %803 = vmatpush.bf16.msra.mxu0 0
        %804 = vmatpush.bf16.msra.mxu0 0
        %805 = vmatpush.bf16.msra.mxu0 0
        %806 = vmatpush.bf16.msra.mxu0 0
        %807 = vmatpush.bf16.msra.mxu0 0
        %808 = vmatpush.bf16.msra.mxu0 0
        %809 = vmatpush.bf16.msra.mxu0 %v800
        %810 = vmatmul.bf16.gmra.mxu0 %v793
        %v811 = vpop.f32.mrf.mxu0
        %v812 = vadd.f32 %v784, %v811
        %v813 = vpop.f32.mrf.mxu0
        %814 = vdwg.mxu0
        %v815 = vld [vmem:[%s777] sm:$0x1]
        %v816 = vld [vmem:[#allocation8] sm:$0xf]
        %v817 = vld [vmem:[#allocation10] sm:$0x1]
        %vm818 = vcmask 56320
        %v820 = vsel %vm818, %v815, 0
        %vm822 = vcmask 1042432
        %vm823 = vcmask 1043456
        %v824 = vsel %vm822, 4294967295, 65535
        %v825 = vsel %vm823, %v824, 0
        %v827 = vand.u32 %v816, %v825
        %829 = vmatpush.bf16.msra.mxu0 0
        %830 = vmatpush.bf16.msra.mxu0 0
        %831 = vmatpush.bf16.msra.mxu0 0
        %832 = vmatpush.bf16.msra.mxu0 0
        %833 = vmatpush.bf16.msra.mxu0 0
        %834 = vmatpush.bf16.msra.mxu0 0
        %835 = vmatpush.bf16.msra.mxu0 0
        %836 = vmatpush.bf16.msra.mxu0 %v827
        %837 = vmatmul.bf16.gmra.mxu0 %v820
        %v838 = vpop.f32.mrf.mxu0
        %v839 = vadd.f32 %v817, %v838
        %v840 = vpop.f32.mrf.mxu0
        %841 = vdwg.mxu0
        %vm842 = vcmask 1040384
        %v843 = vsel %vm842, %v839, 0.0
        %vm844 = vcmask 261120
        %845 = vst.msk [vmem:[%s767] sm:$0xff] %vm844, %v812
        %846 = vst.msk [vmem:[%s767 + $0x8] sm:$0xff] %vm844, %v843
        %v847 = vpack.c.bf16 %v843, %v812
        %v848 = vld [vmem:[%s6] sm:$0xf]
        %v849 = vld [vmem:[%s6 + $0x4] sm:$0xf]
        %v850 = vld [vmem:[%s6 + $0x8] sm:$0xf]
        %v851 = vld [vmem:[%s6 + $0xc] sm:$0xf]
        %v852 = vld [vmem:[#allocation11] sm:$0x1]
        %v854 = vperm.slane %v852, 0
        %v860 = vunpack.c.l.b16 %v848
        %v861 = vunpack.c.l.b16 %v849
        %v862 = vunpack.c.l.b16 %v850
        %v863 = vunpack.c.l.b16 %v851
        %v864 = vpack.c.b16 %v861, %v860
        %v865 = vpack.c.b16 %v863, %v862
        %v869 = vsel %vm844, %v847, 0
        %871 = vmatpush.bf16.msra.mxu0 0
        %872 = vmatpush.bf16.msra.mxu0 0
        %873 = vmatpush.bf16.msra.mxu0 0
        %874 = vmatpush.bf16.msra.mxu0 0
        %875 = vmatpush.bf16.msra.mxu0 0
        %876 = vmatpush.bf16.msra.mxu0 0
        %877 = vmatpush.bf16.msra.mxu0 %v865
        %878 = vmatpush.bf16.msra.mxu0 %v864
        %879 = vmatmul.bf16.gmra.mxu0 %v869
        %v880 = vpop.f32.mrf.mxu0
        %v881 = vadd.f32 %v854, %v880
        %v882 = vpop.f32.mrf.mxu0
        %v883 = vadd.f32 %v854, %v882
        %884 = vdwg.mxu0
        %v885 = vpack.c.bf16 %v881, %v881
        %v886 = vpack.c.bf16 %v883, %v883
        %v887 = vlaneseq
        %v888 = vand.u32 %v887, 127
        %vm889 = vcmp.lt.s32.totalorder %v888, 9
        %v890 = vsel %vm889, 0.0, -1e+30
        %v893 = vunpack.c.l.b16 %v885
        %v894 = vunpack.c.l.b16 %v886
        %v895 = vpack.c.b16 %v894, %v893
        %896 = vrot.lane.b32.xlu0 %v895, 96
        %v897 = vpop.permute.xlu0 %896
        %vm898 = vcmask 64512
        %v900 = vsel %vm898, %v895, 0
        %v903 = vsel %vm898, %v897, 0
        %905 = vmatpush.bf16.xpose.msra.mxu0 0
        %906 = vmatpush.bf16.xpose.msra.mxu0 0
        %907 = vmatpush.bf16.xpose.msra.mxu0 0
        %908 = vmatpush.bf16.xpose.msra.mxu0 0
        %909 = vmatpush.bf16.xpose.msra.mxu0 0
        %910 = vmatpush.bf16.xpose.msra.mxu0 0
        %911 = vmatpush.bf16.xpose.msra.mxu0 0
        %912 = vmatpush.bf16.xpose.msra.mxu0 %v903
        %913 = vmatmul.bf16.gmra.mxu0 %v900
        %v914 = vpop.f32.mrf.mxu0
        %v915 = vadd.f32 %v890, %v914
        %v916 = vpop.f32.mrf.mxu0
        %v917 = vadd.f32 %v890, %v916
        %918 = vdwg.mxu0
        %vm919 = vcmask 130048
        %v920 = vsel %vm919, %v915, -inf
        %921 = vmax.xlane.f32.xlu0 %v920
        %v922 = vpop.xlane.xlu0 %921
        %v923 = vsel %vm919, %v917, -inf
        %924 = vmax.xlane.f32.xlu0 %v923
        %v925 = vpop.xlane.xlu0 %924
        %v926 = vsub.f32 %v915, %v922
        %v927 = vsub.f32 %v917, %v925
        %v928 = vmul.f32 %v926, 1.442695
        %v929 = vpow.pop %v928
        %v930 = vmul.f32 %v927, 1.442695
        %v931 = vpow.pop %v930
        %v932 = vsel %vm919, %v929, 0.0
        %933 = vadd.xlane.f32.xlu0 %v932
        %v934 = vpop.xlane.xlu0 %933
        %v935 = vsel %vm919, %v931, 0.0
        %936 = vadd.xlane.f32.xlu0 %v935
        %v937 = vpop.xlane.xlu0 %936
        %v938 = vrcp.pop %v934
        %v939 = vrcp.pop %v937
        %v940 = vmul.f32 %v929, %v938
        %v941 = vmul.f32 %v931, %v939
        %v942 = vpack.c.bf16 %v941, %v940
        %943 = vrot.lane.b32.xlu0 %v895, 64
        %v944 = vpop.permute.xlu0 %943
        %v947 = vsel %vm919, %v942, 0
        %949 = vmatpush.bf16.msra.mxu0 0
        %950 = vmatpush.bf16.msra.mxu0 0
        %951 = vmatpush.bf16.msra.mxu0 0
        %952 = vmatpush.bf16.msra.mxu0 0
        %953 = vmatpush.bf16.msra.mxu0 0
        %954 = vmatpush.bf16.msra.mxu0 0
        %955 = vmatpush.bf16.msra.mxu0 0
        %956 = vmatpush.bf16.msra.mxu0 %v944
        %957 = vmatmul.bf16.gmra.mxu0 %v947
        %v958 = vpop.f32.mrf.mxu0
        %v959 = vadd.f32 0.0, %v958
        %v960 = vpop.f32.mrf.mxu0
        %v961 = vadd.f32 0.0, %v960
        %962 = vdwg.mxu0
        %963 = vrot.lane.b32.xlu0 %v895, 120
        %v964 = vpop.permute.xlu0 %963
        %965 = vrot.lane.b32.xlu0 %v895, 88
        %v966 = vpop.permute.xlu0 %965
        %v968 = vsel %vm898, %v964, 0
        %v971 = vsel %vm898, %v966, 0
        %973 = vmatpush.bf16.xpose.msra.mxu0 0
        %974 = vmatpush.bf16.xpose.msra.mxu0 0
        %975 = vmatpush.bf16.xpose.msra.mxu0 0
        %976 = vmatpush.bf16.xpose.msra.mxu0 0
        %977 = vmatpush.bf16.xpose.msra.mxu0 0
        %978 = vmatpush.bf16.xpose.msra.mxu0 0
        %979 = vmatpush.bf16.xpose.msra.mxu0 0
        %980 = vmatpush.bf16.xpose.msra.mxu0 %v971
        %981 = vmatmul.bf16.gmra.mxu0 %v968
        %v982 = vpop.f32.mrf.mxu0
        %v983 = vadd.f32 %v890, %v982
        %v984 = vpop.f32.mrf.mxu0
        %v985 = vadd.f32 %v890, %v984
        %986 = vdwg.mxu0
        %v987 = vsel %vm919, %v983, -inf
        %988 = vmax.xlane.f32.xlu0 %v987
        %v989 = vpop.xlane.xlu0 %988
        %v990 = vsel %vm919, %v985, -inf
        %991 = vmax.xlane.f32.xlu0 %v990
        %v992 = vpop.xlane.xlu0 %991
        %v993 = vsub.f32 %v983, %v989
        %v994 = vsub.f32 %v985, %v992
        %v995 = vmul.f32 %v993, 1.442695
        %v996 = vpow.pop %v995
        %v997 = vmul.f32 %v994, 1.442695
        %v998 = vpow.pop %v997
        %v999 = vsel %vm919, %v996, 0.0
        %1000 = vadd.xlane.f32.xlu0 %v999
        %v1001 = vpop.xlane.xlu0 %1000
        %v1002 = vsel %vm919, %v998, 0.0
        %1003 = vadd.xlane.f32.xlu0 %v1002
        %v1004 = vpop.xlane.xlu0 %1003
        %v1005 = vrcp.pop %v1001
        %v1006 = vrcp.pop %v1004
        %v1007 = vmul.f32 %v996, %v1005
        %v1008 = vmul.f32 %v998, %v1006
        %v1009 = vpack.c.bf16 %v1008, %v1007
        %1010 = vrot.lane.b32.xlu0 %v895, 56
        %v1011 = vpop.permute.xlu0 %1010
        %v1014 = vsel %vm919, %v1009, 0
        %1016 = vmatpush.bf16.msra.mxu0 0
        %1017 = vmatpush.bf16.msra.mxu0 0
        %1018 = vmatpush.bf16.msra.mxu0 0
        %1019 = vmatpush.bf16.msra.mxu0 0
        %1020 = vmatpush.bf16.msra.mxu0 0
        %1021 = vmatpush.bf16.msra.mxu0 0
        %1022 = vmatpush.bf16.msra.mxu0 0
        %1023 = vmatpush.bf16.msra.mxu0 %v1011
        %1024 = vmatmul.bf16.gmra.mxu0 %v1014
        %v1025 = vpop.f32.mrf.mxu0
        %v1026 = vadd.f32 0.0, %v1025
        %v1027 = vpop.f32.mrf.mxu0
        %v1028 = vadd.f32 0.0, %v1027
        %1029 = vdwg.mxu0
        %1030 = vrot.lane.b32.xlu0 %v895, 112
        %v1031 = vpop.permute.xlu0 %1030
        %1032 = vrot.lane.b32.xlu0 %v895, 80
        %v1033 = vpop.permute.xlu0 %1032
        %v1035 = vsel %vm898, %v1031, 0
        %v1038 = vsel %vm898, %v1033, 0
        %1040 = vmatpush.bf16.xpose.msra.mxu0 0
        %1041 = vmatpush.bf16.xpose.msra.mxu0 0
        %1042 = vmatpush.bf16.xpose.msra.mxu0 0
        %1043 = vmatpush.bf16.xpose.msra.mxu0 0
        %1044 = vmatpush.bf16.xpose.msra.mxu0 0
        %1045 = vmatpush.bf16.xpose.msra.mxu0 0
        %1046 = vmatpush.bf16.xpose.msra.mxu0 0
        %1047 = vmatpush.bf16.xpose.msra.mxu0 %v1038
        %1048 = vmatmul.bf16.gmra.mxu0 %v1035
        %v1049 = vpop.f32.mrf.mxu0
        %v1050 = vadd.f32 %v890, %v1049
        %v1051 = vpop.f32.mrf.mxu0
        %v1052 = vadd.f32 %v890, %v1051
        %1053 = vdwg.mxu0
        %v1054 = vsel %vm919, %v1050, -inf
        %1055 = vmax.xlane.f32.xlu0 %v1054
        %v1056 = vpop.xlane.xlu0 %1055
        %v1057 = vsel %vm919, %v1052, -inf
        %1058 = vmax.xlane.f32.xlu0 %v1057
        %v1059 = vpop.xlane.xlu0 %1058
        %v1060 = vsub.f32 %v1050, %v1056
        %v1061 = vsub.f32 %v1052, %v1059
        %v1062 = vmul.f32 %v1060, 1.442695
        %v1063 = vpow.pop %v1062
        %v1064 = vmul.f32 %v1061, 1.442695
        %v1065 = vpow.pop %v1064
        %v1066 = vsel %vm919, %v1063, 0.0
        %1067 = vadd.xlane.f32.xlu0 %v1066
        %v1068 = vpop.xlane.xlu0 %1067
        %v1069 = vsel %vm919, %v1065, 0.0
        %1070 = vadd.xlane.f32.xlu0 %v1069
        %v1071 = vpop.xlane.xlu0 %1070
        %v1072 = vrcp.pop %v1068
        %v1073 = vrcp.pop %v1071
        %v1074 = vmul.f32 %v1063, %v1072
        %v1075 = vmul.f32 %v1065, %v1073
        %v1076 = vpack.c.bf16 %v1075, %v1074
        %1077 = vrot.lane.b32.xlu0 %v895, 48
        %v1078 = vpop.permute.xlu0 %1077
        %v1081 = vsel %vm919, %v1076, 0
        %1083 = vmatpush.bf16.msra.mxu0 0
        %1084 = vmatpush.bf16.msra.mxu0 0
        %1085 = vmatpush.bf16.msra.mxu0 0
        %1086 = vmatpush.bf16.msra.mxu0 0
        %1087 = vmatpush.bf16.msra.mxu0 0
        %1088 = vmatpush.bf16.msra.mxu0 0
        %1089 = vmatpush.bf16.msra.mxu0 0
        %1090 = vmatpush.bf16.msra.mxu0 %v1078
        %1091 = vmatmul.bf16.gmra.mxu0 %v1081
        %v1092 = vpop.f32.mrf.mxu0
        %v1093 = vadd.f32 0.0, %v1092
        %v1094 = vpop.f32.mrf.mxu0
        %v1095 = vadd.f32 0.0, %v1094
        %1096 = vdwg.mxu0
        %1097 = vrot.lane.b32.xlu0 %v895, 104
        %v1098 = vpop.permute.xlu0 %1097
        %1099 = vrot.lane.b32.xlu0 %v895, 72
        %v1100 = vpop.permute.xlu0 %1099
        %v1102 = vsel %vm898, %v1098, 0
        %v1105 = vsel %vm898, %v1100, 0
        %1107 = vmatpush.bf16.xpose.msra.mxu0 0
        %1108 = vmatpush.bf16.xpose.msra.mxu0 0
        %1109 = vmatpush.bf16.xpose.msra.mxu0 0
        %1110 = vmatpush.bf16.xpose.msra.mxu0 0
        %1111 = vmatpush.bf16.xpose.msra.mxu0 0
        %1112 = vmatpush.bf16.xpose.msra.mxu0 0
        %1113 = vmatpush.bf16.xpose.msra.mxu0 0
        %1114 = vmatpush.bf16.xpose.msra.mxu0 %v1105
        %1115 = vmatmul.bf16.gmra.mxu0 %v1102
        %v1116 = vpop.f32.mrf.mxu0
        %v1117 = vadd.f32 %v890, %v1116
        %v1118 = vpop.f32.mrf.mxu0
        %v1119 = vadd.f32 %v890, %v1118
        %1120 = vdwg.mxu0
        %v1121 = vsel %vm919, %v1117, -inf
        %1122 = vmax.xlane.f32.xlu0 %v1121
        %v1123 = vpop.xlane.xlu0 %1122
        %v1124 = vsel %vm919, %v1119, -inf
        %1125 = vmax.xlane.f32.xlu0 %v1124
        %v1126 = vpop.xlane.xlu0 %1125
        %v1127 = vsub.f32 %v1117, %v1123
        %v1128 = vsub.f32 %v1119, %v1126
        %v1129 = vmul.f32 %v1127, 1.442695
        %v1130 = vpow.pop %v1129
        %v1131 = vmul.f32 %v1128, 1.442695
        %v1132 = vpow.pop %v1131
        %v1133 = vsel %vm919, %v1130, 0.0
        %1134 = vadd.xlane.f32.xlu0 %v1133
        %v1135 = vpop.xlane.xlu0 %1134
        %v1136 = vsel %vm919, %v1132, 0.0
        %1137 = vadd.xlane.f32.xlu0 %v1136
        %v1138 = vpop.xlane.xlu0 %1137
        %v1139 = vrcp.pop %v1135
        %v1140 = vrcp.pop %v1138
        %v1141 = vmul.f32 %v1130, %v1139
        %v1142 = vmul.f32 %v1132, %v1140
        %v1143 = vpack.c.bf16 %v1142, %v1141
        %1144 = vrot.lane.b32.xlu0 %v895, 40
        %v1145 = vpop.permute.xlu0 %1144
        %v1148 = vsel %vm919, %v1143, 0
        %1150 = vmatpush.bf16.msra.mxu0 0
        %1151 = vmatpush.bf16.msra.mxu0 0
        %1152 = vmatpush.bf16.msra.mxu0 0
        %1153 = vmatpush.bf16.msra.mxu0 0
        %1154 = vmatpush.bf16.msra.mxu0 0
        %1155 = vmatpush.bf16.msra.mxu0 0
        %1156 = vmatpush.bf16.msra.mxu0 0
        %1157 = vmatpush.bf16.msra.mxu0 %v1145
        %1158 = vmatmul.bf16.gmra.mxu0 %v1148
        %v1159 = vpop.f32.mrf.mxu0
        %v1160 = vadd.f32 0.0, %v1159
        %v1161 = vpop.f32.mrf.mxu0
        %v1162 = vadd.f32 0.0, %v1161
        %1163 = vdwg.mxu0
        %1166 = vrot.lane.b32.xlu0 %v1026, 8
        %v1167 = vpop.permute.xlu0 %1166
        %1168 = vrot.lane.b32.xlu0 %v1028, 8
        %v1169 = vpop.permute.xlu0 %1168
        %1174 = vrot.lane.b32.xlu0 %v1093, 16
        %v1175 = vpop.permute.xlu0 %1174
        %1176 = vrot.lane.b32.xlu0 %v1095, 16
        %v1177 = vpop.permute.xlu0 %1176
        %1182 = vrot.lane.b32.xlu0 %v1160, 24
        %v1183 = vpop.permute.xlu0 %1182
        %1184 = vrot.lane.b32.xlu0 %v1162, 24
        %v1185 = vpop.permute.xlu0 %1184
        %v1188 = vsel %vm898, %v959, %v1167
        %v1189 = vsel %vm898, %v961, %v1169
        %v1190 = vsel %vm919, %v1188, %v1175
        %v1191 = vsel %vm919, %v1189, %v1177
        %vm1192 = vcmask 195584
        %v1193 = vsel %vm1192, %v1190, %v1183
        %v1194 = vsel %vm1192, %v1191, %v1185
        %v1195 = vpack.c.bf16 %v1194, %v1193
        %v1196 = vld [vmem:[%s8] sm:$0xf]
        %v1197 = vld [vmem:[%s8 + $0x4] sm:$0xf]
        %v1198 = vld [vmem:[%s8 + $0x8] sm:$0xf]
        %v1199 = vld [vmem:[%s8 + $0xc] sm:$0xf]
        %v1200 = vld [vmem:[#allocation13] sm:$0x1]
        %v1202 = vperm.slane %v1200, 0
        %v1208 = vunpack.c.l.b16 %v1196
        %v1209 = vunpack.c.l.b16 %v1197
        %v1210 = vunpack.c.l.b16 %v1198
        %v1211 = vunpack.c.l.b16 %v1199
        %v1212 = vpack.c.b16 %v1209, %v1208
        %v1213 = vpack.c.b16 %v1211, %v1210
        %v1217 = vsel %vm844, %v1195, 0
        %1219 = vmatpush.bf16.msra.mxu0 0
        %1220 = vmatpush.bf16.msra.mxu0 0
        %1221 = vmatpush.bf16.msra.mxu0 0
        %1222 = vmatpush.bf16.msra.mxu0 0
        %1223 = vmatpush.bf16.msra.mxu0 0
        %1224 = vmatpush.bf16.msra.mxu0 0
        %1225 = vmatpush.bf16.msra.mxu0 %v1213
        %1226 = vmatpush.bf16.msra.mxu0 %v1212
        %1227 = vmatmul.bf16.gmra.mxu0 %v1217
        %v1228 = vpop.f32.mrf.mxu0
        %v1229 = vadd.f32 %v1202, %v1228
        %v1230 = vpop.f32.mrf.mxu0
        %v1231 = vadd.f32 %v1202, %v1230
        %1232 = vdwg.mxu0
        %v1233 = vadd.f32 %v812, %v1229
        %v1234 = vadd.f32 %v843, %v1231
        %v1235 = vld [vmem:[#allocation14] sm:$0x1]
        %v1236 = vld [vmem:[#allocation16] sm:$0x1]
        %v1237 = vsel %vm844, %v1233, 0.0
        %1238 = vadd.xlane.f32.xlu0 %v1237
        %v1239 = vpop.xlane.xlu0 %1238
        %v1240 = vsel %vm844, %v1234, 0.0
        %1241 = vadd.xlane.f32.xlu0 %v1240
        %v1242 = vpop.xlane.xlu0 %1241
        %v1243 = vrcp.pop 32.0
        %v1244 = vmul.f32 32.0, %v1243
        %v1245 = vsub.f32 1.0, %v1244
        %v1246 = vmul.f32 %v1243, %v1245
        %v1247 = vadd.f32 %v1243, %v1246
        %vm1248 = vweird.f32 %v1243
        %v1249 = vsel %vm1248, %v1243, %v1247
        %v1250 = vmul.f32 %v1239, %v1249
        %v1251 = vmul.f32 %v1242, %v1249
        %v1252 = vsub.f32 %v1233, %v1250
        %v1253 = vsub.f32 %v1234, %v1251
        %v1254 = vmul.f32 %v1252, %v1252
        %v1255 = vmul.f32 %v1253, %v1253
        %v1256 = vsel %vm844, %v1254, 0.0
        %1257 = vadd.xlane.f32.xlu0 %v1256
        %v1258 = vpop.xlane.xlu0 %1257
        %v1259 = vsel %vm844, %v1255, 0.0
        %1260 = vadd.xlane.f32.xlu0 %v1259
        %v1261 = vpop.xlane.xlu0 %1260
        %v1262 = vmul.f32 %v1258, %v1249
        %v1263 = vmul.f32 %v1261, %v1249
        %v1264 = vadd.f32 %v1262, 1e-05
        %v1265 = vadd.f32 %v1263, 1e-05
        %v1266 = vrsqrt.pop %v1264
        %v1267 = vmul.f32 %v1266, %v1264
        %v1268 = vmul.f32 %v1267, %v1266
        %v1269 = vmul.f32 0.5, %v1268
        %v1270 = vsub.f32 1.5, %v1269
        %v1271 = vmul.f32 %v1266, %v1270
        %vm1272 = vweird.f32 %v1264
        %vm1273 = vweird.f32 %v1266
        %vm1274 = vmor %vm1272, %vm1273
        %v1275 = vsel %vm1274, %v1266, %v1271
        %v1276 = vrsqrt.pop %v1265
        %v1277 = vmul.f32 %v1276, %v1265
        %v1278 = vmul.f32 %v1277, %v1276
        %v1279 = vmul.f32 0.5, %v1278
        %v1280 = vsub.f32 1.5, %v1279
        %v1281 = vmul.f32 %v1276, %v1280
        %vm1282 = vweird.f32 %v1265
        %vm1283 = vweird.f32 %v1276
        %vm1284 = vmor %vm1282, %vm1283
        %v1285 = vsel %vm1284, %v1276, %v1281
        %v1286 = vmul.f32 %v1252, %v1275
        %v1287 = vmul.f32 %v1253, %v1285
        %v1289 = vperm.slane %v1235, 0
        %v1291 = vmul.f32 %v1286, %v1289
        %v1292 = vmul.f32 %v1287, %v1289
        %v1294 = vperm.slane %v1236, 0
        %v1296 = vadd.f32 %v1291, %v1294
        %v1297 = vadd.f32 %v1292, %v1294
        %v1298 = vpack.c.bf16 %v1297, %v1296
        %v1299 = vld [vmem:[%s12] sm:$0xf]
        %v1300 = vld [vmem:[%s12 + $0x4] sm:$0xf]
        %v1301 = vld [vmem:[%s12 + $0x8] sm:$0xf]
        %v1302 = vld [vmem:[%s12 + $0xc] sm:$0xf]
        %v1303 = vld [vmem:[#allocation17] sm:$0x1]
        %v1305 = vperm.slane %v1303, 0
        %v1311 = vunpack.c.l.b16 %v1299
        %v1312 = vunpack.c.l.b16 %v1300
        %v1313 = vunpack.c.l.b16 %v1301
        %v1314 = vunpack.c.l.b16 %v1302
        %v1315 = vpack.c.b16 %v1312, %v1311
        %v1316 = vpack.c.b16 %v1314, %v1313
        %v1320 = vsel %vm844, %v1298, 0
        %1322 = vmatpush.bf16.msra.mxu0 0
        %1323 = vmatpush.bf16.msra.mxu0 0
        %1324 = vmatpush.bf16.msra.mxu0 0
        %1325 = vmatpush.bf16.msra.mxu0 0
        %1326 = vmatpush.bf16.msra.mxu0 0
        %1327 = vmatpush.bf16.msra.mxu0 0
        %1328 = vmatpush.bf16.msra.mxu0 %v1316
        %1329 = vmatpush.bf16.msra.mxu0 %v1315
        %1330 = vmatmul.bf16.gmra.mxu0 %v1320
        %v1331 = vpop.f32.mrf.mxu0
        %v1332 = vadd.f32 %v1305, %v1331
        %v1333 = vpop.f32.mrf.mxu0
        %v1334 = vadd.f32 %v1305, %v1333
        %1335 = vdwg.mxu0
        %v1336 = vmax.f32 %v1332, 0.0
        %v1337 = vmax.f32 %v1334, 0.0
        %v1338 = vpack.c.bf16 %v1337, %v1336
        %v1339 = vld [vmem:[%s14] sm:$0xf]
        %v1340 = vld [vmem:[%s14 + $0x4] sm:$0xf]
        %v1341 = vld [vmem:[%s14 + $0x8] sm:$0xf]
        %v1342 = vld [vmem:[%s14 + $0xc] sm:$0xf]
        %v1343 = vld [vmem:[%s14 + $0x10] sm:$0xf]
        %v1344 = vld [vmem:[%s14 + $0x14] sm:$0xf]
        %v1345 = vld [vmem:[%s14 + $0x18] sm:$0xf]
        %v1346 = vld [vmem:[%s14 + $0x1c] sm:$0xf]
        %v1347 = vld [vmem:[%s15] sm:$0x1]
        %v1349 = vperm.slane %v1347, 0
        %v1359 = vunpack.c.l.b16 %v1339
        %v1360 = vunpack.c.l.b16 %v1340
        %v1361 = vunpack.c.l.b16 %v1341
        %v1362 = vunpack.c.l.b16 %v1342
        %v1363 = vunpack.c.l.b16 %v1343
        %v1364 = vunpack.c.l.b16 %v1344
        %v1365 = vunpack.c.l.b16 %v1345
        %v1366 = vunpack.c.l.b16 %v1346
        %v1367 = vpack.c.b16 %v1360, %v1359
        %v1368 = vpack.c.b16 %v1362, %v1361
        %v1369 = vpack.c.b16 %v1364, %v1363
        %v1370 = vpack.c.b16 %v1366, %v1365
        %vm1375 = vcmask 523264
        %v1377 = vsel %vm1375, %v1338, 0
        %1379 = vmatpush.bf16.msra.mxu0 0
        %1380 = vmatpush.bf16.msra.mxu0 0
        %1381 = vmatpush.bf16.msra.mxu0 0
        %1382 = vmatpush.bf16.msra.mxu0 0
        %1383 = vmatpush.bf16.msra.mxu0 %v1370
        %1384 = vmatpush.bf16.msra.mxu0 %v1369
        %1385 = vmatpush.bf16.msra.mxu0 %v1368
        %1386 = vmatpush.bf16.msra.mxu0 %v1367
        %1387 = vmatmul.bf16.gmra.mxu0 %v1377
        %v1388 = vpop.f32.mrf.mxu0
        %v1389 = vadd.f32 %v1349, %v1388
        %v1390 = vpop.f32.mrf.mxu0
        %v1391 = vadd.f32 %v1349, %v1390
        %1392 = vdwg.mxu0
        %v1393 = vadd.f32 %v1296, %v1389
        %v1394 = vadd.f32 %v1297, %v1391
        %v1395 = vld [vmem:[%s16] sm:$0x1]
        %v1396 = vld [vmem:[%s17] sm:$0x1]
        %v1397 = vsel %vm844, %v1393, 0.0
        %1398 = vadd.xlane.f32.xlu0 %v1397
        %v1399 = vpop.xlane.xlu0 %1398
        %v1400 = vsel %vm844, %v1394, 0.0
        %1401 = vadd.xlane.f32.xlu0 %v1400
        %v1402 = vpop.xlane.xlu0 %1401
        %v1403 = vmul.f32 %v1399, %v1249
        %v1404 = vmul.f32 %v1402, %v1249
        %v1405 = vsub.f32 %v1393, %v1403
        %v1406 = vsub.f32 %v1394, %v1404
        %v1407 = vmul.f32 %v1405, %v1405
        %v1408 = vmul.f32 %v1406, %v1406
        %v1409 = vsel %vm844, %v1407, 0.0
        %1410 = vadd.xlane.f32.xlu0 %v1409
        %v1411 = vpop.xlane.xlu0 %1410
        %v1412 = vsel %vm844, %v1408, 0.0
        %1413 = vadd.xlane.f32.xlu0 %v1412
        %v1414 = vpop.xlane.xlu0 %1413
        %v1415 = vmul.f32 %v1411, %v1249
        %v1416 = vmul.f32 %v1414, %v1249
        %v1417 = vadd.f32 %v1415, 1e-05
        %v1418 = vadd.f32 %v1416, 1e-05
        %v1419 = vrsqrt.pop %v1417
        %v1420 = vmul.f32 %v1419, %v1417
        %v1421 = vmul.f32 %v1420, %v1419
        %v1422 = vmul.f32 0.5, %v1421
        %v1423 = vsub.f32 1.5, %v1422
        %v1424 = vmul.f32 %v1419, %v1423
        %vm1425 = vweird.f32 %v1417
        %vm1426 = vweird.f32 %v1419
        %vm1427 = vmor %vm1425, %vm1426
        %v1428 = vsel %vm1427, %v1419, %v1424
        %v1429 = vrsqrt.pop %v1418
        %v1430 = vmul.f32 %v1429, %v1418
        %v1431 = vmul.f32 %v1430, %v1429
        %v1432 = vmul.f32 0.5, %v1431
        %v1433 = vsub.f32 1.5, %v1432
        %v1434 = vmul.f32 %v1429, %v1433
        %vm1435 = vweird.f32 %v1418
        %vm1436 = vweird.f32 %v1429
        %vm1437 = vmor %vm1435, %vm1436
        %v1438 = vsel %vm1437, %v1429, %v1434
        %v1439 = vmul.f32 %v1405, %v1428
        %v1440 = vmul.f32 %v1406, %v1438
        %v1442 = vperm.slane %v1395, 0
        %v1444 = vmul.f32 %v1439, %v1442
        %v1445 = vmul.f32 %v1440, %v1442
        %v1447 = vperm.slane %v1396, 0
        %v1449 = vadd.f32 %v1444, %v1447
        %v1450 = vadd.f32 %v1445, %v1447
        %1451 = vst.msk [vmem:[%s774] sm:$0xff] %vm844, %v1449
        %1452 = vst.msk [vmem:[%s774 + $0x8] sm:$0xff] %vm844, %v1450
        %s1453 = sand.u32 %s441, 1
        %s1454 = scalar_lea.sflag [#allocation4], %s1453
        %s1455 = sand.u32 %s441, 1
        %s1456 = smul.addr %s1455, 16
        %s1457 = scalar_lea.vmem [#allocation19], %s1456
        %s1458 = sand.u32 %s467, 1
        %s1459 = scalar_lea.sflag [#allocation21], %s1458
        %s1460 = sand.u32 %s467, 1
        %s1461 = smul.addr %s1460, 16
        %s1462 = scalar_lea.vmem [#allocation20], %s1461
        // Predicated region
        $region133: #{tpu_custom_call.1} parent=91 // pred_check
          %p1463 = pneg %p451
        $region134: #{tpu_custom_call.1} parent=91 // pred_check_branch
          %1465 = sbr.rel (%p1463) target = $region136
        $region135: #{tpu_custom_call.1} parent=91 // pred_region
          %1467 = vsyncadd %s1454, 0
          %s1468 = smul.addr %s45, 2
          %s1469 = smul.addr %s1468, 8
          %s1470 = scalar_lea.hbm %s18, %s1469
          %s1471 = sshll.u32 %s1457, 4
          %s1472 = int_to_ptr.vmem [resolvable:$true] %s1471
          %s1473 = sshll.u32 %s1470, 4
          %s1474 = int_to_ptr.hbm [resolvable:$true] %s1473
          %1479 = dma.vmem_to_hbm [thread:$0]  %s1472, 256, %s1474, %s1454, 128, 128, 8
        $region136: #{tpu_custom_call.1} parent=91 // pred_fallthru
          _
        // Predicated region
        $region137: #{tpu_custom_call.1} parent=91 // pred_check
          %p1480 = pneg %p477
        $region138: #{tpu_custom_call.1} parent=91 // pred_check_branch
          %1482 = sbr.rel (%p1480) target = $region140
        $region139: #{tpu_custom_call.1} parent=91 // pred_region
          %1484 = vsyncadd %s1459, 0
          %s1485 = smul.addr %s45, 2
          %s1486 = smul.addr %s1485, 8
          %s1487 = scalar_lea.hbm %s19, %s1486
          %s1488 = sshll.u32 %s1462, 4
          %s1489 = int_to_ptr.vmem [resolvable:$true] %s1488
          %s1490 = sshll.u32 %s1487, 4
          %s1491 = int_to_ptr.hbm [resolvable:$true] %s1490
          %1496 = dma.vmem_to_hbm [thread:$0]  %s1489, 256, %s1491, %s1459, 128, 128, 8
        $region140: #{tpu_custom_call.1} parent=91 // pred_fallthru
          _
      $region92: #{tpu_custom_call.1} parent=5 // pred_fallthru
        _
      %p1497 = scmp.le.s32.totalorder 2, %s40
      // Predicated region
      $region141: #{tpu_custom_call.1} parent=5 // pred_check
        %p1498 = pneg %p1497
      $region142: #{tpu_custom_call.1} parent=5 // pred_check_branch
        %1500 = sbr.rel (%p1498) target = $region144
      $region143: #{tpu_custom_call.1} parent=5 // pred_region
        %s1501 = ssub.s32 %s40, 2
        // Predicated region
        $region145: #{tpu_custom_call.1} parent=143 // pred_check
          %p1502 = pneg %p457
        $region146: #{tpu_custom_call.1} parent=143 // pred_check_branch
          %1504 = sbr.rel (%p1502) target = $region148
        $region147: #{tpu_custom_call.1} parent=143 // pred_region
          %s1505 = sand.u32 %s442, 1
          %s1506 = scalar_lea.sflag [#allocation4], %s1505
          %s1507 = sand.u32 %s442, 1
          %s1508 = smul.addr %s1507, 16
          %s1509 = scalar_lea.vmem [#allocation19], %s1508
          %1511 = dma.done %s1506, 256
        $region148: #{tpu_custom_call.1} parent=143 // pred_fallthru
          _
        // Predicated region
        $region149: #{tpu_custom_call.1} parent=143 // pred_check
          %p1512 = pneg %p483
        $region150: #{tpu_custom_call.1} parent=143 // pred_check_branch
          %1514 = sbr.rel (%p1512) target = $region152
        $region151: #{tpu_custom_call.1} parent=143 // pred_region
          %s1515 = sand.u32 %s468, 1
          %s1516 = scalar_lea.sflag [#allocation21], %s1515
          %s1517 = sand.u32 %s468, 1
          %s1518 = smul.addr %s1517, 16
          %s1519 = scalar_lea.vmem [#allocation20], %s1518
          %1521 = dma.done %s1516, 256
        $region152: #{tpu_custom_call.1} parent=143 // pred_fallthru
          _
      $region144: #{tpu_custom_call.1} parent=5 // pred_fallthru
        _
    $region6: #{tpu_custom_call.1} parent=1 // loop_footer
      %s44 = sadd.s32 1, %s40
    $region7: #{tpu_custom_call.1} parent=1 // loop_footer_branch
      %39 = sbr.rel target = $region3
    $region8: #{tpu_custom_call.1} parent=1 // loop_exit
      _
    %1522 = vsyncpa [#allocation3], 1
    %s1523 = scalar_lea.sflag [#allocation3], 1
    %1524 = vsyncpa %s1523, 1
    %1525 = vsyncpa [#allocation6], 1
    %1526 = vsyncpa [#allocation9], 1
    %1527 = vsyncpa [#allocation12], 1
    %1528 = vsyncpa [#allocation15], 1
    %1529 = vsyncpa [#allocation18], 1
    %1530 = vsyncpa [#allocation4], 1
    %s1531 = scalar_lea.sflag [#allocation4], 1
    %1532 = vsyncpa %s1531, 1
    %1533 = vsyncpa [#allocation21], 1
    %s1534 = scalar_lea.sflag [#allocation21], 1
    %1535 = vsyncpa %s1534, 1

</llo_original>
